<compile_context>
chip_gen: v5e
topology: v5e:2x2
jax: 0.10.0
libtpu: 0.0.40
codegen_flags: <defaults>
</compile_context>

<pallas_src>
import math

import jax
import jax.numpy as jnp
from jax.experimental import pallas as pl
from jax.experimental.pallas import tpu as pltpu


# --------------------------------------------------------------------------- #
# VMEM sizing helpers (generation aware).                                       #
# --------------------------------------------------------------------------- #
def _pad_up(n, m):
    return -(-n // m) * m


def _blk_bytes(shape, itemsize):
    """Conservative VMEM bytes of ONE buffer of a block (sublane->8, lane->128 pad)."""
    if len(shape) == 1:
        return _pad_up(int(shape[0]), 128) * itemsize
    lead = 1
    for d in shape[:-2]:
        lead *= int(d)
    return lead * _pad_up(int(shape[-2]), 8) * _pad_up(int(shape[-1]), 128) * itemsize


def _vmem_budget_bytes():
    """(scoped vmem_limit_bytes, tile-footprint budget) for the current TPU gen."""
    cap = 64 << 20
    try:
        info = pltpu.get_tpu_info()
        cap = int(getattr(info, "vmem_capacity_bytes", cap) or cap)
    except Exception:  # conservative fallback (also covers interpret mode)
        pass
    limit = min((3 * cap) // 4, 96 << 20)   # v5e/v6e -> 96 MiB, v7x -> 48 MiB
    budget = (3 * limit) // 4               # leave compiler headroom
    return limit, budget


def _adj_tiling(B, N, Fout, adj_itemsize, budget):
    """Pick (bb, tm, Npad) for the adj @ support kernel.

    Largest adj row tile whose (double-buffered, lane-padded) footprint fits the
    VMEM budget; bb is capped at B//2 so the 'parallel' batch axis keeps >=2
    blocks (v7x megacore)."""
    max_bb = min(8, max(1, B // 2))

    def per_b(tm, npad):
        return (2 * _blk_bytes((tm, npad), adj_itemsize)   # adj row tile
                + 2 * _blk_bytes((npad, Fout), 2)          # bf16 support block
                + 2 * _blk_bytes((tm, Fout), 4)            # fp32 out tile
                + 2 * _blk_bytes((1, 1), 4))               # dequant scale

    cands = [(N, N)]                                        # full-row tile, no padding
    for t in (1024, 512, 256, 128, 64, 32, 16, 8):
        if t < N and N % t == 0:
            cands.append((t, N))
    for t in (1024, 512, 256, 128):                         # cdiv/pad tiling (no divisor)
        if t < N and N % t != 0:
            cands.append((t, _pad_up(N, t)))

    for tm, npad in cands:
        need = per_b(tm, npad)
        for bb in range(max_bb, 0, -1):
            if B % bb == 0 and bb * need <= budget:
                return bb, tm, npad
    tm = min(N, 128)
    return 1, tm, _pad_up(N, tm)


def _support_tiling(B, Npad, Fin, Fout, budget):
    max_bb = min(8, max(1, B // 2))

    def per_b(tn):
        return (2 * _blk_bytes((tn, Fin), 2)
                + 2 * _blk_bytes((Fin, Fout), 2)
                + 2 * _blk_bytes((tn, Fout), 2))

    cands = [Npad] + [t for t in (2048, 1024, 512, 256, 128, 64, 32, 16, 8)
                      if t < Npad and Npad % t == 0]
    for tn in cands:
        need = per_b(tn)
        for bb in range(max_bb, 0, -1):
            if B % bb == 0 and bb * need <= budget:
                return bb, tn
    return 1, cands[-1]


def _bn_batch_block(B, F_, N, budget):
    per_b = 2 * _blk_bytes((F_, N), 4) + 2 * _blk_bytes((F_, N), 4)   # in + out buffers
    for bbn in range(min(8, B), 0, -1):
        if B % bbn == 0 and bbn * per_b <= budget:
            return bbn
    return 1


# --------------------------------------------------------------------------- #
# Kernel 1: support = (mask * x) @ W  (bf16 out; node mask pre-folded into x).  #
# --------------------------------------------------------------------------- #
def support_kernel(x_ref, w_ref, o_ref):
    # x (bb, tn, Fin) bf16 | w (bb, Fin, Fout) bf16 | o (bb, tn, Fout) bf16
    o_ref[...] = jnp.einsum(
        "bnk,bkf->bnf", x_ref[...], w_ref[...],
        preferred_element_type=jnp.float32).astype(o_ref.dtype)


def support_matmul(x_bf, w_bf, *, budget, vmem_limit):
    B, Np, Fin = x_bf.shape
    Fout = w_bf.shape[-1]
    bb, tn = _support_tiling(B, Np, Fin, Fout, budget)
    return pl.pallas_call(
        support_kernel,
        out_shape=jax.ShapeDtypeStruct((B, Np, Fout), jnp.bfloat16),
        grid_spec=pltpu.PrefetchScalarGridSpec(
            num_scalar_prefetch=0,
            grid=(B // bb, Np // tn),
            in_specs=[
                pl.BlockSpec((bb, tn, Fin), lambda b, n: (b, n, 0)),
                pl.BlockSpec((bb, Fin, Fout), lambda b, n: (b, 0, 0)),
            ],
            out_specs=pl.BlockSpec((bb, tn, Fout), lambda b, n: (b, n, 0)),
        ),
        compiler_params=pltpu.CompilerParams(
            dimension_semantics=("parallel", "parallel"),
            vmem_limit_bytes=vmem_limit,
        ),
    )(x_bf, w_bf)


# --------------------------------------------------------------------------- #
# Kernel 2: out = (row-masked adj) @ support; adj streamed int8 (or bf16).      #
# --------------------------------------------------------------------------- #
def adj_kernel(a_ref, s_ref, sc_ref, o_ref):
    # a (bb, tm, Np) int8/bf16 | s (bb, Np, Fout) bf16 | sc (bb, 1, 1) f32
    # o (bb, tm, Fout) f32
    a = a_ref[...]
    if a.dtype != jnp.bfloat16:
        # int8-quantized adjacency: values <=127 are exact in bf16; the dequant
        # scale is folded into the post-matmul multiply below.
        a = a.astype(jnp.float32).astype(jnp.bfloat16)
    out = jnp.einsum("brn,bnf->brf", a, s_ref[...],
                     preferred_element_type=jnp.float32)
    o_ref[...] = (out * sc_ref[...]).astype(o_ref.dtype)


def adj_matmul(adj_in, support_bf, scale, *, bb, tm, vmem_limit):
    B, Np, _ = adj_in.shape
    Fout = support_bf.shape[-1]
    return pl.pallas_call(
        adj_kernel,
        out_shape=jax.ShapeDtypeStruct((B, Np, Fout), jnp.float32),
        grid_spec=pltpu.PrefetchScalarGridSpec(
            num_scalar_prefetch=0,
            grid=(B // bb, Np // tm),
            in_specs=[
                pl.BlockSpec((bb, tm, Np), lambda b, r: (b, r, 0)),    # adj row tile
                pl.BlockSpec((bb, Np, Fout), lambda b, r: (b, 0, 0)),  # support (const over r)
                pl.BlockSpec((bb, 1, 1), lambda b, r: (b, 0, 0)),      # dequant scale
            ],
            out_specs=pl.BlockSpec((bb, tm, Fout), lambda b, r: (b, r, 0)),
        ),
        compiler_params=pltpu.CompilerParams(
            dimension_semantics=("parallel", "arbitrary"),
            vmem_limit_bytes=vmem_limit,
        ),
    )(adj_in, support_bf, scale)


# --------------------------------------------------------------------------- #
# Kernel 3: BatchNorm1d batch statistics on the (B, Fout, N) view layout.       #
# --------------------------------------------------------------------------- #
def bn_stats_kernel(y_ref, sum_ref, ssq_ref):
    @pl.when(pl.program_id(0) == 0)
    def _():
        sum_ref[...] = jnp.zeros_like(sum_ref)
        ssq_ref[...] = jnp.zeros_like(ssq_ref)
    y = y_ref[...].astype(jnp.float32)                      # (bbn, Fout, N)
    sum_ref[...] += jnp.sum(jnp.sum(y, axis=-1, keepdims=True), axis=0)
    ssq_ref[...] += jnp.sum(jnp.sum(y * y, axis=-1, keepdims=True), axis=0)


def bn_stats(y, *, budget, vmem_limit):
    B, F_, N = y.shape
    bbn = _bn_batch_block(B, F_, N, budget)
    return pl.pallas_call(
        bn_stats_kernel,
        out_shape=(jax.ShapeDtypeStruct((F_, 1), jnp.float32),
                   jax.ShapeDtypeStruct((F_, 1), jnp.float32)),
        grid_spec=pltpu.PrefetchScalarGridSpec(
            num_scalar_prefetch=0,
            grid=(B // bbn,),
            in_specs=[pl.BlockSpec((bbn, F_, N), lambda b: (b, 0, 0))],
            out_specs=[pl.BlockSpec((F_, 1), lambda b: (0, 0)),
                       pl.BlockSpec((F_, 1), lambda b: (0, 0))],
        ),
        compiler_params=pltpu.CompilerParams(
            dimension_semantics=("arbitrary",),
            vmem_limit_bytes=vmem_limit),
    )(y)


# --------------------------------------------------------------------------- #
# Kernel 4: normalize (scale/shift) + tanh, blocked over batch elements.        #
# --------------------------------------------------------------------------- #
def bn_norm_tanh_kernel(y_ref, scale_ref, shift_ref, o_ref):
    y = y_ref[...].astype(jnp.float32)                      # (bbn, Fout, N)
    o_ref[...] = jnp.tanh(y * scale_ref[...] + shift_ref[...]).astype(o_ref.dtype)


def bn_norm_tanh(y, scale, shift, *, budget, vmem_limit):
    B, F_, N = y.shape
    bbn = _bn_batch_block(B, F_, N, budget)
    return pl.pallas_call(
        bn_norm_tanh_kernel,
        out_shape=jax.ShapeDtypeStruct((B, F_, N), jnp.float32),
        grid_spec=pltpu.PrefetchScalarGridSpec(
            num_scalar_prefetch=0,
            grid=(B // bbn,),
            in_specs=[
                pl.BlockSpec((bbn, F_, N), lambda b: (b, 0, 0)),
                pl.BlockSpec((F_, 1), lambda b: (0, 0)),
                pl.BlockSpec((F_, 1), lambda b: (0, 0)),
            ],
            out_specs=pl.BlockSpec((bbn, F_, N), lambda b: (b, 0, 0)),
        ),
        compiler_params=pltpu.CompilerParams(
            dimension_semantics=("parallel",),
            vmem_limit_bytes=vmem_limit),
    )(y, scale, shift)


# --------------------------------------------------------------------------- #
# Forward pass (matches GraphConvolution.forward with bias=False).              #
# --------------------------------------------------------------------------- #
def graph_convolution_forward(x, adj, mask, weight, gamma, beta,
                              eps=1e-5, quantize_adj=True):
    B, N, _ = x.shape
    Fout = weight.shape[-1]
    vmem_limit, budget = _vmem_budget_bytes()

    mask_f = mask.astype(jnp.float32)
    # Fold the node mask into x ((mask*x)@W == (x@W)*mask) and into the adj rows
    # ((mask_r*adj_r)@support == (adj_r@support)*mask_r): no mask streams in-kernel.
    x_m = (x * mask_f[..., None]).astype(jnp.bfloat16)
    w_bf = weight.astype(jnp.bfloat16)
    adj_m = adj.astype(jnp.float32) * mask_f[:, :, None]

    adj_itemsize = 1 if quantize_adj else 2
    bb, tm, Npad = _adj_tiling(B, N, Fout, adj_itemsize, budget)
    if Npad != N:
        pad = Npad - N
        x_m = jnp.pad(x_m, ((0, 0), (0, pad), (0, 0)))
        adj_m = jnp.pad(adj_m, ((0, 0), (0, pad), (0, pad)))

    if quantize_adj:
        # Per-batch-element symmetric int8 quantization: halves the dominant HBM
        # stream; dequant scale is applied after the matmul inside the kernel.
        amax = jnp.max(jnp.abs(adj_m), axis=(1, 2), keepdims=True)
        scale = jnp.where(amax > 0, amax / 127.0, 1.0).astype(jnp.float32)
        adj_in = jnp.clip(jnp.round(adj_m / scale), -127.0, 127.0).astype(jnp.int8)
    else:
        scale = jnp.ones((B, 1, 1), jnp.float32)
        adj_in = adj_m.astype(jnp.bfloat16)

    support = support_matmul(x_m, w_bf, budget=budget, vmem_limit=vmem_limit)
    out = adj_matmul(adj_in, support, scale, bb=bb, tm=tm, vmem_limit=vmem_limit)
    if Npad != N:
        out = out[:, :N, :]

    # torch: output.view(B, out_features, -1)  -> pure row-major reshape
    y = out.reshape(B, Fout, N)

    # BatchNorm1d training-mode batch stats (biased variance), fp32 accumulation.
    # TODO(synk): single-pass E[x^2]-E[x]^2 is cancellation-prone if |mean| >> std.
    # TODO(synk): BatchNorm1d running-mean/var buffers are not tracked (single
    # training-mode forward only).
    s, ssq = bn_stats(y, budget=budget, vmem_limit=vmem_limit)
    cnt = float(B * N)
    mean = s / cnt
    var = jnp.maximum(ssq / cnt - mean * mean, 0.0)
    invstd = jax.lax.rsqrt(var + eps)
    bn_scale = gamma.reshape(Fout, 1).astype(jnp.float32) * invstd
    bn_shift = beta.reshape(Fout, 1).astype(jnp.float32) - mean * bn_scale

    z = bn_norm_tanh(y, bn_scale, bn_shift, budget=budget, vmem_limit=vmem_limit)

    # torch: x.view(B, -1, out_features) -> pure row-major reshape back
    return z.reshape(B, N, Fout)


# --------------------------------------------------------------------------- #
# References for the self-check.                                                #
# --------------------------------------------------------------------------- #
def reference_forward(x, adj, mask, weight, gamma, beta, *,
                      mimic_kernel=False, quantize_adj=False, eps=1e-5):
    B, N, _ = x.shape
    Fo = weight.shape[-1]
    m3 = mask[..., None]
    if mimic_kernel:
        xm = (x * m3).astype(jnp.bfloat16)
        w = weight.astype(jnp.bfloat16)
        sup = jnp.einsum("bnk,bkf->bnf", xm, w,
                         preferred_element_type=jnp.float32).astype(jnp.bfloat16)
        adj_m = adj * mask[:, :, None]
        if quantize_adj:
            amax = jnp.max(jnp.abs(adj_m), axis=(1, 2), keepdims=True)
            scale = jnp.where(amax > 0, amax / 127.0, 1.0)
            adj_q = jnp.clip(jnp.round(adj_m / scale), -127.0, 127.0)
            out = jnp.einsum("bnm,bmf->bnf", adj_q.astype(jnp.bfloat16), sup,
                             preferred_element_type=jnp.float32) * scale
        else:
            out = jnp.einsum("bnm,bmf->bnf", adj_m.astype(jnp.bfloat16), sup,
                             preferred_element_type=jnp.float32)
    else:
        sup = jnp.einsum("bnk,bkf->bnf", x, weight) * m3
        out = jnp.einsum("bnm,bmf->bnf", adj, sup) * m3
    y = out.reshape(B, Fo, N)
    mean = jnp.mean(y, axis=(0, 2), keepdims=True)
    var = jnp.mean((y - mean) ** 2, axis=(0, 2), keepdims=True)
    yn = (y - mean) / jnp.sqrt(var + eps)
    yn = yn * gamma.reshape(1, -1, 1) + beta.reshape(1, -1, 1)
    return jnp.tanh(yn).reshape(B, N, Fo)


if __name__ == "__main__":
    B, N, Fin, Fout = 4, 32, 16, 32

    key = jax.random.PRNGKey(0)
    kx, ka, kw = jax.random.split(key, 3)

    x = jax.random.normal(kx, (B, N, Fin), dtype=jnp.float32)
    adj = jax.random.uniform(ka, (B, N, N), dtype=jnp.float32)

    # deterministic padding mask: first `length[b]` nodes are valid
    lengths = jnp.array([32, 20, 12, 27], dtype=jnp.int32)
    mask = (jnp.arange(N)[None, :] < lengths[:, None]).astype(jnp.float32)  # (B, N)

    # parameter init matching reset_parameters(): U(-stdv, stdv), stdv = 1/sqrt(Fin)
    stdv = 1.0 / math.sqrt(Fin)
    weight = jax.random.uniform(kw, (B, Fin, Fout), minval=-stdv, maxval=stdv,
                                dtype=jnp.float32)
    gamma = jnp.ones((Fout,), dtype=jnp.float32)   # BatchNorm1d affine defaults
    beta = jnp.zeros((Fout,), dtype=jnp.float32)

    fwd = jax.jit(graph_convolution_forward, static_argnames=("quantize_adj",))

    out_q = jax.block_until_ready(fwd(x, adj, mask, weight, gamma, beta,
                                      quantize_adj=True))
    out_f = jax.block_until_ready(fwd(x, adj, mask, weight, gamma, beta,
                                      quantize_adj=False))
    assert out_q.shape == (B, N, Fout) and out_f.shape == (B, N, Fout)

    # tight checks against references that mirror the kernel numerics
    ref_bf = reference_forward(x, adj, mask, weight, gamma, beta,
                               mimic_kernel=True, quantize_adj=False)
    ref_q = reference_forward(x, adj, mask, weight, gamma, beta,
                              mimic_kernel=True, quantize_adj=True)
    assert jnp.allclose(out_f, ref_bf, rtol=2e-3, atol=2e-3), \
        "bf16-adj path mismatch vs mimic reference"
    assert jnp.allclose(out_q, ref_q, rtol=2e-3, atol=2e-3), \
        "int8-adj path mismatch vs mimic reference"

    # loose sanity checks against the pure-fp32 reference
    ref_f32 = reference_forward(x, adj, mask, weight, gamma, beta)
    assert jnp.allclose(out_f, ref_f32, rtol=5e-2, atol=5e-2), \
        "bf16-adj path mismatch vs fp32 reference"
    assert jnp.allclose(out_q, ref_f32, rtol=7.5e-2, atol=7.5e-2), \
        "int8-adj path mismatch vs fp32 reference"

    print("KERNEL_OK")
</pallas_src>

<mosaic_0001>
module attributes {stable_mosaic.version = 11 : i64} {
  func.func @bn_stats_kernel(%arg0: i32, %arg1: memref<4x32x32xf32, #tpu.memory_space<vmem>>, %arg2: memref<32x1xf32, #tpu.memory_space<vmem>>, %arg3: memref<32x1xf32, #tpu.memory_space<vmem>>) attributes {dimension_semantics = [#tpu.dimension_semantics<arbitrary>], iteration_bounds = array<i64: 1>, scalar_prefetch = 0 : i64, scratch_operands = 0 : i64, tpu.core_type = #tpu.core_type<tc>, window_params = [{transform_indices = @transform_0, window_bounds = array<i64: 4, 32, 32>}, {pipeline_mode = #tpu.pipeline_mode<synchronous>, transform_indices = @transform_1, window_bounds = array<i64: 32, 1>}, {pipeline_mode = #tpu.pipeline_mode<synchronous>, transform_indices = @transform_2, window_bounds = array<i64: 32, 1>}]} {
    %c0_i32 = arith.constant 0 : i32
    %0 = arith.cmpi eq, %arg0, %c0_i32 : i32
    %1 = arith.extui %0 : i1 to i32
    %c0_i32_0 = arith.constant 0 : i32
    %2 = arith.cmpi ne, %1, %c0_i32_0 : i32
    scf.if %2 {
      %cst_14 = arith.constant 0.000000e+00 : f32
      %17 = vector.broadcast %cst_14 : f32 to vector<32x1xf32>
      %c0_15 = arith.constant 0 : index
      %c0_16 = arith.constant 0 : index
      %18 = vector.load %arg2[%c0_15, %c0_16] : memref<32x1xf32, #tpu.memory_space<vmem>>, vector<32x1xf32>
      tpu.vector_store %arg2[%c0_15, %c0_16], %17 {strides = array<i32>} : memref<32x1xf32, #tpu.memory_space<vmem>>, vector<32x1xf32>,
      %cst_17 = arith.constant 0.000000e+00 : f32
      %19 = vector.broadcast %cst_17 : f32 to vector<32x1xf32>
      %c0_18 = arith.constant 0 : index
      %c0_19 = arith.constant 0 : index
      %20 = vector.load %arg3[%c0_18, %c0_19] : memref<32x1xf32, #tpu.memory_space<vmem>>, vector<32x1xf32>
      tpu.vector_store %arg3[%c0_18, %c0_19], %19 {strides = array<i32>} : memref<32x1xf32, #tpu.memory_space<vmem>>, vector<32x1xf32>,
    } else {
    }
    %c0 = arith.constant 0 : index
    %c0_1 = arith.constant 0 : index
    %c0_2 = arith.constant 0 : index
    %3 = vector.load %arg1[%c0, %c0_1, %c0_2] : memref<4x32x32xf32, #tpu.memory_space<vmem>>, vector<4x32x32xf32>
    %c0_3 = arith.constant 0 : index
    %c0_4 = arith.constant 0 : index
    %4 = vector.load %arg2[%c0_3, %c0_4] : memref<32x1xf32, #tpu.memory_space<vmem>>, vector<32x1xf32>
    %cst = arith.constant dense<0.000000e+00> : vector<4x32xf32>
    %5 = vector.multi_reduction <add>, %3, %cst [2] : vector<4x32x32xf32> to vector<4x32xf32>
    %6 = vector.shape_cast %5 : vector<4x32xf32> to vector<4x32x1xf32>
    %cst_5 = arith.constant dense<0.000000e+00> : vector<32x1xf32>
    %7 = vector.multi_reduction <add>, %6, %cst_5 [0] : vector<4x32x1xf32> to vector<32x1xf32>
    %8 = arith.addf %4, %7 : vector<32x1xf32>
    %c0_6 = arith.constant 0 : index
    %c0_7 = arith.constant 0 : index
    %9 = vector.load %arg2[%c0_6, %c0_7] : memref<32x1xf32, #tpu.memory_space<vmem>>, vector<32x1xf32>
    tpu.vector_store %arg2[%c0_6, %c0_7], %8 {strides = array<i32>} : memref<32x1xf32, #tpu.memory_space<vmem>>, vector<32x1xf32>,
    %c0_8 = arith.constant 0 : index
    %c0_9 = arith.constant 0 : index
    %10 = vector.load %arg3[%c0_8, %c0_9] : memref<32x1xf32, #tpu.memory_space<vmem>>, vector<32x1xf32>
    %11 = arith.mulf %3, %3 : vector<4x32x32xf32>
    %cst_10 = arith.constant dense<0.000000e+00> : vector<4x32xf32>
    %12 = vector.multi_reduction <add>, %11, %cst_10 [2] : vector<4x32x32xf32> to vector<4x32xf32>
    %13 = vector.shape_cast %12 : vector<4x32xf32> to vector<4x32x1xf32>
    %cst_11 = arith.constant dense<0.000000e+00> : vector<32x1xf32>
    %14 = vector.multi_reduction <add>, %13, %cst_11 [0] : vector<4x32x1xf32> to vector<32x1xf32>
    %15 = arith.addf %10, %14 : vector<32x1xf32>
    %c0_12 = arith.constant 0 : index
    %c0_13 = arith.constant 0 : index
    %16 = vector.load %arg3[%c0_12, %c0_13] : memref<32x1xf32, #tpu.memory_space<vmem>>, vector<32x1xf32>
    tpu.vector_store %arg3[%c0_12, %c0_13], %15 {strides = array<i32>} : memref<32x1xf32, #tpu.memory_space<vmem>>, vector<32x1xf32>,
    return
  }
  func.func @transform_0(%arg0: i32) -> (i32, i32, i32) {
    %c0_i32 = arith.constant 0 : i32
    %c0_i32_0 = arith.constant 0 : i32
    %c0_i32_1 = arith.constant 0 : i32
    return %arg0, %c0_i32, %c0_i32_0 : i32, i32, i32
  }
  func.func @transform_1(%arg0: i32) -> (i32, i32) {
    %c0_i32 = arith.constant 0 : i32
    %c0_i32_0 = arith.constant 0 : i32
    %c0_i32_1 = arith.constant 0 : i32
    return %c0_i32, %c0_i32_0 : i32, i32
  }
  func.func @transform_2(%arg0: i32) -> (i32, i32) {
    %c0_i32 = arith.constant 0 : i32
    %c0_i32_0 = arith.constant 0 : i32
    %c0_i32_1 = arith.constant 0 : i32
    return %c0_i32, %c0_i32_0 : i32, i32
  }
}

module attributes {stable_mosaic.version = 11 : i64} {
  func.func @adj_kernel(%arg0: i32, %arg1: i32, %arg2: memref<2x32x32xi8, #tpu.memory_space<vmem>>, %arg3: memref<2x32x32xbf16, #tpu.memory_space<vmem>>, %arg4: memref<2x1x1xf32, #tpu.memory_space<vmem>>, %arg5: memref<2x32x32xf32, #tpu.memory_space<vmem>>) attributes {dimension_semantics = [#tpu.dimension_semantics<parallel>, #tpu.dimension_semantics<arbitrary>], iteration_bounds = array<i64: 2, 1>, scalar_prefetch = 0 : i64, scratch_operands = 0 : i64, tpu.core_type = #tpu.core_type<tc>, window_params = [{transform_indices = @transform_0, window_bounds = array<i64: 2, 32, 32>}, {transform_indices = @transform_1, window_bounds = array<i64: 2, 32, 32>}, {transform_indices = @transform_2, window_bounds = array<i64: 2, 1, 1>}, {transform_indices = @transform_3, window_bounds = array<i64: 2, 32, 32>}]} {
    %c0 = arith.constant 0 : index
    %c0_0 = arith.constant 0 : index
    %c0_1 = arith.constant 0 : index
    %0 = vector.load %arg2[%c0, %c0_0, %c0_1] : memref<2x32x32xi8, #tpu.memory_space<vmem>>, vector<2x32x32xi8>
    %1 = arith.sitofp %0 : vector<2x32x32xi8> to vector<2x32x32xf32>
    %2 = arith.truncf %1 : vector<2x32x32xf32> to vector<2x32x32xbf16>
    %c0_2 = arith.constant 0 : index
    %c0_3 = arith.constant 0 : index
    %c0_4 = arith.constant 0 : index
    %3 = vector.load %arg3[%c0_2, %c0_3, %c0_4] : memref<2x32x32xbf16, #tpu.memory_space<vmem>>, vector<2x32x32xbf16>
    "tpu.trace_start"() <{level = 10 : i32, message = "brn,bnf->brf"}> : () -> ()
    %cst = arith.constant dense<0.000000e+00> : vector<2x32x32xf32>
    %4 = tpu.matmul %2, %3, %cst {dimension_numbers = #tpu.dot_dimension_numbers<[2], [1], [1], [2], [0, 0, 0, 1, 1, 2], [0], [0]>} : vector<2x32x32xbf16>, vector<2x32x32xbf16>, vector<2x32x32xf32> -> vector<2x32x32xf32>
    "tpu.trace_stop"() : () -> ()
    %c0_5 = arith.constant 0 : index
    %c0_6 = arith.constant 0 : index
    %c0_7 = arith.constant 0 : index
    %5 = vector.load %arg4[%c0_5, %c0_6, %c0_7] : memref<2x1x1xf32, #tpu.memory_space<vmem>>, vector<2x1x1xf32>
    %6 = vector.broadcast %5 : vector<2x1x1xf32> to vector<2x32x32xf32>
    %7 = arith.mulf %4, %6 : vector<2x32x32xf32>
    %c0_8 = arith.constant 0 : index
    %c0_9 = arith.constant 0 : index
    %c0_10 = arith.constant 0 : index
    %8 = vector.load %arg5[%c0_8, %c0_9, %c0_10] : memref<2x32x32xf32, #tpu.memory_space<vmem>>, vector<2x32x32xf32>
    tpu.vector_store %arg5[%c0_8, %c0_9, %c0_10], %7 {strides = array<i32>} : memref<2x32x32xf32, #tpu.memory_space<vmem>>, vector<2x32x32xf32>,
    return
  }
  func.func @transform_0(%arg0: i32, %arg1: i32) -> (i32, i32, i32) {
    %c0_i32 = arith.constant 0 : i32
    %c0_i32_0 = arith.constant 0 : i32
    return %arg0, %arg1, %c0_i32 : i32, i32, i32
  }
  func.func @transform_1(%arg0: i32, %arg1: i32) -> (i32, i32, i32) {
    %c0_i32 = arith.constant 0 : i32
    %c0_i32_0 = arith.constant 0 : i32
    %c0_i32_1 = arith.constant 0 : i32
    return %arg0, %c0_i32, %c0_i32_0 : i32, i32, i32
  }
  func.func @transform_2(%arg0: i32, %arg1: i32) -> (i32, i32, i32) {
    %c0_i32 = arith.constant 0 : i32
    %c0_i32_0 = arith.constant 0 : i32
    %c0_i32_1 = arith.constant 0 : i32
    return %arg0, %c0_i32, %c0_i32_0 : i32, i32, i32
  }
  func.func @transform_3(%arg0: i32, %arg1: i32) -> (i32, i32, i32) {
    %c0_i32 = arith.constant 0 : i32
    %c0_i32_0 = arith.constant 0 : i32
    return %arg0, %arg1, %c0_i32 : i32, i32, i32
  }
}

module attributes {stable_mosaic.version = 11 : i64} {
  func.func @support_kernel(%arg0: i32, %arg1: i32, %arg2: memref<2x32x16xbf16, #tpu.memory_space<vmem>>, %arg3: memref<2x16x32xbf16, #tpu.memory_space<vmem>>, %arg4: memref<2x32x32xbf16, #tpu.memory_space<vmem>>) attributes {dimension_semantics = [#tpu.dimension_semantics<parallel>, #tpu.dimension_semantics<parallel>], iteration_bounds = array<i64: 2, 1>, scalar_prefetch = 0 : i64, scratch_operands = 0 : i64, tpu.core_type = #tpu.core_type<tc>, window_params = [{transform_indices = @transform_0, window_bounds = array<i64: 2, 32, 16>}, {transform_indices = @transform_1, window_bounds = array<i64: 2, 16, 32>}, {transform_indices = @transform_2, window_bounds = array<i64: 2, 32, 32>}]} {
    %c0 = arith.constant 0 : index
    %c0_0 = arith.constant 0 : index
    %c0_1 = arith.constant 0 : index
    %0 = vector.load %arg2[%c0, %c0_0, %c0_1] : memref<2x32x16xbf16, #tpu.memory_space<vmem>>, vector<2x32x16xbf16>
    %c0_2 = arith.constant 0 : index
    %c0_3 = arith.constant 0 : index
    %c0_4 = arith.constant 0 : index
    %1 = vector.load %arg3[%c0_2, %c0_3, %c0_4] : memref<2x16x32xbf16, #tpu.memory_space<vmem>>, vector<2x16x32xbf16>
    "tpu.trace_start"() <{level = 10 : i32, message = "bnk,bkf->bnf"}> : () -> ()
    %cst = arith.constant dense<0.000000e+00> : vector<2x32x32xf32>
    %2 = tpu.matmul %0, %1, %cst {dimension_numbers = #tpu.dot_dimension_numbers<[2], [1], [1], [2], [0, 0, 0, 1, 1, 2], [0], [0]>} : vector<2x32x16xbf16>, vector<2x16x32xbf16>, vector<2x32x32xf32> -> vector<2x32x32xf32>
    "tpu.trace_stop"() : () -> ()
    %3 = arith.truncf %2 : vector<2x32x32xf32> to vector<2x32x32xbf16>
    %c0_5 = arith.constant 0 : index
    %c0_6 = arith.constant 0 : index
    %c0_7 = arith.constant 0 : index
    %4 = vector.load %arg4[%c0_5, %c0_6, %c0_7] : memref<2x32x32xbf16, #tpu.memory_space<vmem>>, vector<2x32x32xbf16>
    tpu.vector_store %arg4[%c0_5, %c0_6, %c0_7], %3 {strides = array<i32>} : memref<2x32x32xbf16, #tpu.memory_space<vmem>>, vector<2x32x32xbf16>,
    return
  }
  func.func @transform_0(%arg0: i32, %arg1: i32) -> (i32, i32, i32) {
    %c0_i32 = arith.constant 0 : i32
    %c0_i32_0 = arith.constant 0 : i32
    return %arg0, %arg1, %c0_i32 : i32, i32, i32
  }
  func.func @transform_1(%arg0: i32, %arg1: i32) -> (i32, i32, i32) {
    %c0_i32 = arith.constant 0 : i32
    %c0_i32_0 = arith.constant 0 : i32
    %c0_i32_1 = arith.constant 0 : i32
    return %arg0, %c0_i32, %c0_i32_0 : i32, i32, i32
  }
  func.func @transform_2(%arg0: i32, %arg1: i32) -> (i32, i32, i32) {
    %c0_i32 = arith.constant 0 : i32
    %c0_i32_0 = arith.constant 0 : i32
    return %arg0, %arg1, %c0_i32 : i32, i32, i32
  }
}

module attributes {stable_mosaic.version = 11 : i64} {
  func.func @bn_norm_tanh_kernel(%arg0: i32, %arg1: memref<4x32x32xf32, #tpu.memory_space<vmem>>, %arg2: memref<32x1xf32, #tpu.memory_space<vmem>>, %arg3: memref<32x1xf32, #tpu.memory_space<vmem>>, %arg4: memref<4x32x32xf32, #tpu.memory_space<vmem>>) attributes {dimension_semantics = [#tpu.dimension_semantics<parallel>], iteration_bounds = array<i64: 1>, scalar_prefetch = 0 : i64, scratch_operands = 0 : i64, tpu.core_type = #tpu.core_type<tc>, window_params = [{transform_indices = @transform_0, window_bounds = array<i64: 4, 32, 32>}, {pipeline_mode = #tpu.pipeline_mode<synchronous>, transform_indices = @transform_1, window_bounds = array<i64: 32, 1>}, {pipeline_mode = #tpu.pipeline_mode<synchronous>, transform_indices = @transform_2, window_bounds = array<i64: 32, 1>}, {transform_indices = @transform_3, window_bounds = array<i64: 4, 32, 32>}]} {
    %c0 = arith.constant 0 : index
    %c0_0 = arith.constant 0 : index
    %c0_1 = arith.constant 0 : index
    %0 = vector.load %arg1[%c0, %c0_0, %c0_1] : memref<4x32x32xf32, #tpu.memory_space<vmem>>, vector<4x32x32xf32>
    %c0_2 = arith.constant 0 : index
    %c0_3 = arith.constant 0 : index
    %1 = vector.load %arg2[%c0_2, %c0_3] : memref<32x1xf32, #tpu.memory_space<vmem>>, vector<32x1xf32>
    %2 = vector.shape_cast %1 : vector<32x1xf32> to vector<1x32x1xf32>
    %3 = vector.broadcast %2 : vector<1x32x1xf32> to vector<4x32x32xf32>
    %4 = arith.mulf %0, %3 : vector<4x32x32xf32>
    %c0_4 = arith.constant 0 : index
    %c0_5 = arith.constant 0 : index
    %5 = vector.load %arg3[%c0_4, %c0_5] : memref<32x1xf32, #tpu.memory_space<vmem>>, vector<32x1xf32>
    %6 = vector.shape_cast %5 : vector<32x1xf32> to vector<1x32x1xf32>
    %7 = vector.broadcast %6 : vector<1x32x1xf32> to vector<4x32x32xf32>
    %8 = arith.addf %4, %7 : vector<4x32x32xf32>
    %9 = math.tanh %8 : vector<4x32x32xf32>
    %c0_6 = arith.constant 0 : index
    %c0_7 = arith.constant 0 : index
    %c0_8 = arith.constant 0 : index
    %10 = vector.load %arg4[%c0_6, %c0_7, %c0_8] : memref<4x32x32xf32, #tpu.memory_space<vmem>>, vector<4x32x32xf32>
    tpu.vector_store %arg4[%c0_6, %c0_7, %c0_8], %9 {strides = array<i32>} : memref<4x32x32xf32, #tpu.memory_space<vmem>>, vector<4x32x32xf32>,
    return
  }
  func.func @transform_0(%arg0: i32) -> (i32, i32, i32) {
    %c0_i32 = arith.constant 0 : i32
    %c0_i32_0 = arith.constant 0 : i32
    %c0_i32_1 = arith.constant 0 : i32
    return %arg0, %c0_i32, %c0_i32_0 : i32, i32, i32
  }
  func.func @transform_1(%arg0: i32) -> (i32, i32) {
    %c0_i32 = arith.constant 0 : i32
    %c0_i32_0 = arith.constant 0 : i32
    %c0_i32_1 = arith.constant 0 : i32
    return %c0_i32, %c0_i32_0 : i32, i32
  }
  func.func @transform_2(%arg0: i32) -> (i32, i32) {
    %c0_i32 = arith.constant 0 : i32
    %c0_i32_0 = arith.constant 0 : i32
    %c0_i32_1 = arith.constant 0 : i32
    return %c0_i32, %c0_i32_0 : i32, i32
  }
  func.func @transform_3(%arg0: i32) -> (i32, i32, i32) {
    %c0_i32 = arith.constant 0 : i32
    %c0_i32_0 = arith.constant 0 : i32
    %c0_i32_1 = arith.constant 0 : i32
    return %arg0, %c0_i32, %c0_i32_0 : i32, i32, i32
  }
}

</mosaic_0001>

<llo_original>
// kernel: graph_convolution_forward.6
$region0: #{graph_convolution_forward.6}
  #allocation0 [shape = 'u32[]', space=smem, size = 0x4, offset = 0x4, fixed_abs, tag = 'smem constant byte address 0x4 - core index']
  #allocation1 [shape = 'u32[72,128]{1,0:T(1,128)}', space=vmem, size = 0x9000, scoped, tag = 'internal scratch']
  %s0 = inlined_call_operand.vmem [shape: f32[4,32,32], index: 0, kind: input, shape index: {}]
  %s1 = inlined_call_operand.vmem [shape: f32[32,1], index: 1, kind: output, shape index: {0}]
  %s2 = inlined_call_operand.vmem [shape: f32[32,1], index: 2, kind: output, shape index: {1}]
  %3 = xla_tuple %s1, %s2
  %s4 = sld [smem:[#allocation0]]
  $region26: #{graph_convolution_forward.6} parent=0
    _
  %s6 = ssub.s32 1, %s4
  %s7 = scalar_select 0, %s6, %s4
  // Predicated region
  $region2: #{graph_convolution_forward.6} parent=0 // pred_check
    _
  $region3: #{graph_convolution_forward.6} parent=0 // pred_check_branch
    %9 = sbr.rel (0) target = $region5
  $region4: #{graph_convolution_forward.6} parent=0 // pred_region
    _
  $region5: #{graph_convolution_forward.6} parent=0 // pred_fallthru
    _
  %p10 = scmp.eq.s32.totalorder 0, 0
  // Predicated region
  $region6: #{graph_convolution_forward.6} parent=0 // pred_check
    %p11 = pneg %p10
  $region7: #{graph_convolution_forward.6} parent=0 // pred_check_branch
    %13 = sbr.rel (%p11) target = $region9
  $region8: #{graph_convolution_forward.6} parent=0 // pred_region
    %vm14 = vcmask 7168
    %15 = vst.msk [vmem:[%s1] sm:$0xff] %vm14, 0.0
    %16 = vst.msk [vmem:[%s1 + $0x8] sm:$0xff] %vm14, 0.0
    %17 = vst.msk [vmem:[%s1 + $0x10] sm:$0xff] %vm14, 0.0
    %18 = vst.msk [vmem:[%s1 + $0x18] sm:$0xff] %vm14, 0.0
    %19 = vst.msk [vmem:[%s2] sm:$0xff] %vm14, 0.0
    %20 = vst.msk [vmem:[%s2 + $0x8] sm:$0xff] %vm14, 0.0
    %21 = vst.msk [vmem:[%s2 + $0x10] sm:$0xff] %vm14, 0.0
    %22 = vst.msk [vmem:[%s2 + $0x18] sm:$0xff] %vm14, 0.0
  $region9: #{graph_convolution_forward.6} parent=0 // pred_fallthru
    _
  %v23 = vld [vmem:[%s0] sm:$0xff]
  %v24 = vld [vmem:[%s0 + $0x8] sm:$0xff]
  %v25 = vld [vmem:[%s0 + $0x10] sm:$0xff]
  %v26 = vld [vmem:[%s0 + $0x18] sm:$0xff]
  %v27 = vld [vmem:[%s0 + $0x20] sm:$0xff]
  %v28 = vld [vmem:[%s0 + $0x28] sm:$0xff]
  %v29 = vld [vmem:[%s0 + $0x30] sm:$0xff]
  %v30 = vld [vmem:[%s0 + $0x38] sm:$0xff]
  %v31 = vld [vmem:[%s0 + $0x40] sm:$0xff]
  %v32 = vld [vmem:[%s0 + $0x48] sm:$0xff]
  %v33 = vld [vmem:[%s0 + $0x50] sm:$0xff]
  %v34 = vld [vmem:[%s0 + $0x58] sm:$0xff]
  %v35 = vld [vmem:[%s0 + $0x60] sm:$0xff]
  %v36 = vld [vmem:[%s0 + $0x68] sm:$0xff]
  %v37 = vld [vmem:[%s0 + $0x70] sm:$0xff]
  %v38 = vld [vmem:[%s0 + $0x78] sm:$0xff]
  %v39 = vld [vmem:[%s1] sm:$0xff]
  %v40 = vld [vmem:[%s1 + $0x8] sm:$0xff]
  %v41 = vld [vmem:[%s1 + $0x10] sm:$0xff]
  %v42 = vld [vmem:[%s1 + $0x18] sm:$0xff]
  %vm43 = vcmask 261120
  %v44 = vsel %vm43, %v23, 0.0
  %45 = vadd.xlane.f32.xlu0 %v44
  %v46 = vpop.xlane.xlu0 %45
  %v47 = vsel %vm43, %v24, 0.0
  %48 = vadd.xlane.f32.xlu0 %v47
  %v49 = vpop.xlane.xlu0 %48
  %v50 = vsel %vm43, %v25, 0.0
  %51 = vadd.xlane.f32.xlu0 %v50
  %v52 = vpop.xlane.xlu0 %51
  %v53 = vsel %vm43, %v26, 0.0
  %54 = vadd.xlane.f32.xlu0 %v53
  %v55 = vpop.xlane.xlu0 %54
  %v56 = vsel %vm43, %v27, 0.0
  %57 = vadd.xlane.f32.xlu0 %v56
  %v58 = vpop.xlane.xlu0 %57
  %v59 = vsel %vm43, %v28, 0.0
  %60 = vadd.xlane.f32.xlu0 %v59
  %v61 = vpop.xlane.xlu0 %60
  %v62 = vsel %vm43, %v29, 0.0
  %63 = vadd.xlane.f32.xlu0 %v62
  %v64 = vpop.xlane.xlu0 %63
  %v65 = vsel %vm43, %v30, 0.0
  %66 = vadd.xlane.f32.xlu0 %v65
  %v67 = vpop.xlane.xlu0 %66
  %v68 = vsel %vm43, %v31, 0.0
  %69 = vadd.xlane.f32.xlu0 %v68
  %v70 = vpop.xlane.xlu0 %69
  %v71 = vsel %vm43, %v32, 0.0
  %72 = vadd.xlane.f32.xlu0 %v71
  %v73 = vpop.xlane.xlu0 %72
  %v74 = vsel %vm43, %v33, 0.0
  %75 = vadd.xlane.f32.xlu0 %v74
  %v76 = vpop.xlane.xlu0 %75
  %v77 = vsel %vm43, %v34, 0.0
  %78 = vadd.xlane.f32.xlu0 %v77
  %v79 = vpop.xlane.xlu0 %78
  %v80 = vsel %vm43, %v35, 0.0
  %81 = vadd.xlane.f32.xlu0 %v80
  %v82 = vpop.xlane.xlu0 %81
  %v83 = vsel %vm43, %v36, 0.0
  %84 = vadd.xlane.f32.xlu0 %v83
  %v85 = vpop.xlane.xlu0 %84
  %v86 = vsel %vm43, %v37, 0.0
  %87 = vadd.xlane.f32.xlu0 %v86
  %v88 = vpop.xlane.xlu0 %87
  %v89 = vsel %vm43, %v38, 0.0
  %90 = vadd.xlane.f32.xlu0 %v89
  %v91 = vpop.xlane.xlu0 %90
  %v92 = vadd.f32 %v46, %v58
  %v93 = vadd.f32 %v92, %v70
  %v94 = vadd.f32 %v93, %v82
  %v95 = vadd.f32 %v49, %v61
  %v96 = vadd.f32 %v95, %v73
  %v97 = vadd.f32 %v96, %v85
  %v98 = vadd.f32 %v52, %v64
  %v99 = vadd.f32 %v98, %v76
  %v100 = vadd.f32 %v99, %v88
  %v101 = vadd.f32 %v55, %v67
  %v102 = vadd.f32 %v101, %v79
  %v103 = vadd.f32 %v102, %v91
  %v104 = vadd.f32 %v39, %v94
  %v105 = vadd.f32 %v40, %v97
  %v106 = vadd.f32 %v41, %v100
  %v107 = vadd.f32 %v42, %v103
  %vm108 = vcmask 7168
  %109 = vst.msk [vmem:[%s1] sm:$0xff] %vm108, %v104
  %110 = vst.msk [vmem:[%s1 + $0x8] sm:$0xff] %vm108, %v105
  %111 = vst.msk [vmem:[%s1 + $0x10] sm:$0xff] %vm108, %v106
  %112 = vst.msk [vmem:[%s1 + $0x18] sm:$0xff] %vm108, %v107
  %v113 = vld [vmem:[%s2] sm:$0xff]
  %v114 = vld [vmem:[%s2 + $0x8] sm:$0xff]
  %v115 = vld [vmem:[%s2 + $0x10] sm:$0xff]
  %v116 = vld [vmem:[%s2 + $0x18] sm:$0xff]
  %v117 = vmul.f32 %v23, %v23
  %v118 = vmul.f32 %v24, %v24
  %v119 = vmul.f32 %v25, %v25
  %v120 = vmul.f32 %v26, %v26
  %v121 = vmul.f32 %v27, %v27
  %v122 = vmul.f32 %v28, %v28
  %v123 = vmul.f32 %v29, %v29
  %v124 = vmul.f32 %v30, %v30
  %v125 = vmul.f32 %v31, %v31
  %v126 = vmul.f32 %v32, %v32
  %v127 = vmul.f32 %v33, %v33
  %v128 = vmul.f32 %v34, %v34
  %v129 = vmul.f32 %v35, %v35
  %v130 = vmul.f32 %v36, %v36
  %v131 = vmul.f32 %v37, %v37
  %v132 = vmul.f32 %v38, %v38
  %v133 = vsel %vm43, %v117, 0.0
  %134 = vadd.xlane.f32.xlu0 %v133
  %v135 = vpop.xlane.xlu0 %134
  %v136 = vsel %vm43, %v118, 0.0
  %137 = vadd.xlane.f32.xlu0 %v136
  %v138 = vpop.xlane.xlu0 %137
  %v139 = vsel %vm43, %v119, 0.0
  %140 = vadd.xlane.f32.xlu0 %v139
  %v141 = vpop.xlane.xlu0 %140
  %v142 = vsel %vm43, %v120, 0.0
  %143 = vadd.xlane.f32.xlu0 %v142
  %v144 = vpop.xlane.xlu0 %143
  %v145 = vsel %vm43, %v121, 0.0
  %146 = vadd.xlane.f32.xlu0 %v145
  %v147 = vpop.xlane.xlu0 %146
  %v148 = vsel %vm43, %v122, 0.0
  %149 = vadd.xlane.f32.xlu0 %v148
  %v150 = vpop.xlane.xlu0 %149
  %v151 = vsel %vm43, %v123, 0.0
  %152 = vadd.xlane.f32.xlu0 %v151
  %v153 = vpop.xlane.xlu0 %152
  %v154 = vsel %vm43, %v124, 0.0
  %155 = vadd.xlane.f32.xlu0 %v154
  %v156 = vpop.xlane.xlu0 %155
  %v157 = vsel %vm43, %v125, 0.0
  %158 = vadd.xlane.f32.xlu0 %v157
  %v159 = vpop.xlane.xlu0 %158
  %v160 = vsel %vm43, %v126, 0.0
  %161 = vadd.xlane.f32.xlu0 %v160
  %v162 = vpop.xlane.xlu0 %161
  %v163 = vsel %vm43, %v127, 0.0
  %164 = vadd.xlane.f32.xlu0 %v163
  %v165 = vpop.xlane.xlu0 %164
  %v166 = vsel %vm43, %v128, 0.0
  %167 = vadd.xlane.f32.xlu0 %v166
  %v168 = vpop.xlane.xlu0 %167
  %v169 = vsel %vm43, %v129, 0.0
  %170 = vadd.xlane.f32.xlu0 %v169
  %v171 = vpop.xlane.xlu0 %170
  %v172 = vsel %vm43, %v130, 0.0
  %173 = vadd.xlane.f32.xlu0 %v172
  %v174 = vpop.xlane.xlu0 %173
  %v175 = vsel %vm43, %v131, 0.0
  %176 = vadd.xlane.f32.xlu0 %v175
  %v177 = vpop.xlane.xlu0 %176
  %v178 = vsel %vm43, %v132, 0.0
  %179 = vadd.xlane.f32.xlu0 %v178
  %v180 = vpop.xlane.xlu0 %179
  %v181 = vadd.f32 %v135, %v147
  %v182 = vadd.f32 %v181, %v159
  %v183 = vadd.f32 %v182, %v171
  %v184 = vadd.f32 %v138, %v150
  %v185 = vadd.f32 %v184, %v162
  %v186 = vadd.f32 %v185, %v174
  %v187 = vadd.f32 %v141, %v153
  %v188 = vadd.f32 %v187, %v165
  %v189 = vadd.f32 %v188, %v177
  %v190 = vadd.f32 %v144, %v156
  %v191 = vadd.f32 %v190, %v168
  %v192 = vadd.f32 %v191, %v180
  %v193 = vadd.f32 %v113, %v183
  %v194 = vadd.f32 %v114, %v186
  %v195 = vadd.f32 %v115, %v189
  %v196 = vadd.f32 %v116, %v192
  %197 = vst.msk [vmem:[%s2] sm:$0xff] %vm108, %v193
  %198 = vst.msk [vmem:[%s2 + $0x8] sm:$0xff] %vm108, %v194
  %199 = vst.msk [vmem:[%s2 + $0x10] sm:$0xff] %vm108, %v195
  %200 = vst.msk [vmem:[%s2 + $0x18] sm:$0xff] %vm108, %v196
  // Predicated region
  $region10: #{graph_convolution_forward.6} parent=0 // pred_check
    _
  $region11: #{graph_convolution_forward.6} parent=0 // pred_check_branch
    %202 = sbr.rel (0) target = $region13
  $region12: #{graph_convolution_forward.6} parent=0 // pred_region
    _
  $region13: #{graph_convolution_forward.6} parent=0 // pred_fallthru
    _
  // Predicated region
  $region14: #{graph_convolution_forward.6} parent=0 // pred_check
    _
  $region15: #{graph_convolution_forward.6} parent=0 // pred_check_branch
    %204 = sbr.rel (0) target = $region17
  $region16: #{graph_convolution_forward.6} parent=0 // pred_region
    _
  $region17: #{graph_convolution_forward.6} parent=0 // pred_fallthru
    _
  // Predicated region
  $region18: #{graph_convolution_forward.6} parent=0 // pred_check
    _
  $region19: #{graph_convolution_forward.6} parent=0 // pred_check_branch
    %206 = sbr.rel (0) target = $region21
  $region20: #{graph_convolution_forward.6} parent=0 // pred_region
    _
  $region21: #{graph_convolution_forward.6} parent=0 // pred_fallthru
    _
  // Predicated region
  $region22: #{graph_convolution_forward.6} parent=0 // pred_check
    _
  $region23: #{graph_convolution_forward.6} parent=0 // pred_check_branch
    %208 = sbr.rel (0) target = $region25
  $region24: #{graph_convolution_forward.6} parent=0 // pred_region
    _
  $region25: #{graph_convolution_forward.6} parent=0 // pred_fallthru
    _

// kernel: graph_convolution_forward.4
$region0: #{graph_convolution_forward.4}
  #allocation0 [shape = 'u32[]', space=smem, size = 0x4, offset = 0x4, fixed_abs, tag = 'smem constant byte address 0x4 - core index']
  #allocation1 [shape = 'u32[72,128]{1,0:T(1,128)}', space=vmem, size = 0x9000, scoped, tag = 'internal scratch']
  %s0 = inlined_call_operand.vmem [shape: bf16[4,32,16], index: 0, kind: input, shape index: {}]
  %s1 = inlined_call_operand.vmem [shape: bf16[4,16,32], index: 1, kind: input, shape index: {}]
  %s2 = inlined_call_operand.vmem [shape: bf16[4,32,32], index: 2, kind: output, shape index: {}]
  %s3 = sld [smem:[#allocation0]]
  $region41: #{graph_convolution_forward.4} parent=0
    _
  %s5 = ssub.s32 1, %s3
  %s6 = scalar_select 0, %s5, %s3
  loop: start=0, step=1, limit=4
  $region2: #{graph_convolution_forward.4} parent=0 // loop_pre_header
    _
  $region3: #{graph_convolution_forward.4} parent=0 // loop_header
    %s8 = sphi 0, %s12
    %p9 = scmp.ge.s32.totalorder %s8, 4
    %s15 = sphi 0, %s27
    %s16 = sphi 0, %s23
    %s17 = sphi 0, %s15
    %s18 = sphi 0, %s16
    %s19 = sphi 0, %s17
    %s20 = sphi 0, %s18
    %s32 = sphi 0, %s34
    %s35 = sphi 0, %s32
    %s36 = sphi 0, %s35
    %s52 = sphi 0, %s36
    %s58 = sphi 0, %s60
    %s61 = sphi 0, %s58
    %s62 = sphi 0, %s61
    %s78 = sphi 0, %s62
    %s86 = sphi 0, %s88
    %s89 = sphi 0, %s86
    %s90 = sphi 0, %s89
    %s106 = sphi 0, %s90
  $region4: #{graph_convolution_forward.4} parent=0 // loop_header_branch
    %11 = sbr.rel (%p9) target = $region8
  $region5: #{graph_convolution_forward.4} parent=0 // loop_body
    %s13 = ssub.s32 %s8, 1
    %s14 = ssub.s32 %s8, 2
    %s21 = sadd.s32 1, %s16
    %p22 = scmp.ge.s32.totalorder %s21, 1
    %s23 = scalar_select %p22, 0, %s21
    %s24 = sadd.s32 1, %s15
    %s25 = scalar_select %p22, %s24, %s15
    %p26 = scmp.ge.s32.totalorder %s25, 2
    %s27 = scalar_select %p26, 0, %s25
    %s28 = ssub.s32 %s15, %s27
    %s29 = ssub.s32 %s16, %s23
    %s30 = sor.u32 %s28, %s29
    %p31 = scmp.eq.s32.totalorder %s30, 0
    %s33 = sadd.s32 %s32, 1
    %s34 = scalar_select %p31, %s32, %s33
    %p37 = pneg %p31
    %p38 = scmp.eq.s32.totalorder %s8, 1
    %p39 = por %p37, %p38
    %p40 = scmp.ne.s32.totalorder %s32, %s35
    %p41 = scmp.eq.s32.totalorder %s8, 0
    %p42 = por %p40, %p41
    %p43 = scmp.ne.s32.totalorder %s32, %s35
    %p44 = scmp.eq.s32.totalorder %s13, 1
    %p45 = por %p43, %p44
    %p46 = scmp.ne.s32.totalorder %s35, %s36
    %p47 = scmp.eq.s32.totalorder %s13, 0
    %p48 = por %p46, %p47
    %p49 = scmp.ne.s32.totalorder %s35, %s36
    %p50 = scmp.eq.s32.totalorder %s14, 1
    %p51 = por %p49, %p50
    %p53 = scmp.ne.s32.totalorder %s36, %s52
    %p54 = scmp.eq.s32.totalorder %s14, 0
    %p55 = por %p53, %p54
    %s56 = ssub.s32 %s15, %s27
    %p57 = scmp.eq.s32.totalorder %s56, 0
    %s59 = sadd.s32 %s58, 1
    %s60 = scalar_select %p57, %s58, %s59
    %p63 = pneg %p57
    %p64 = scmp.eq.s32.totalorder %s8, 1
    %p65 = por %p63, %p64
    %p66 = scmp.ne.s32.totalorder %s58, %s61
    %p67 = scmp.eq.s32.totalorder %s8, 0
    %p68 = por %p66, %p67
    %p69 = scmp.ne.s32.totalorder %s58, %s61
    %p70 = scmp.eq.s32.totalorder %s13, 1
    %p71 = por %p69, %p70
    %p72 = scmp.ne.s32.totalorder %s61, %s62
    %p73 = scmp.eq.s32.totalorder %s13, 0
    %p74 = por %p72, %p73
    %p75 = scmp.ne.s32.totalorder %s61, %s62
    %p76 = scmp.eq.s32.totalorder %s14, 1
    %p77 = por %p75, %p76
    %p79 = scmp.ne.s32.totalorder %s62, %s78
    %p80 = scmp.eq.s32.totalorder %s14, 0
    %p81 = por %p79, %p80
    %s82 = ssub.s32 %s15, %s27
    %s83 = ssub.s32 %s16, %s23
    %s84 = sor.u32 %s82, %s83
    %p85 = scmp.eq.s32.totalorder %s84, 0
    %s87 = sadd.s32 %s86, 1
    %s88 = scalar_select %p85, %s86, %s87
    %p91 = pneg %p85
    %p92 = scmp.eq.s32.totalorder %s8, 1
    %p93 = por %p91, %p92
    %p94 = scmp.ne.s32.totalorder %s86, %s89
    %p95 = scmp.eq.s32.totalorder %s8, 0
    %p96 = por %p94, %p95
    %p97 = scmp.ne.s32.totalorder %s86, %s89
    %p98 = scmp.eq.s32.totalorder %s13, 1
    %p99 = por %p97, %p98
    %p100 = scmp.ne.s32.totalorder %s89, %s90
    %p101 = scmp.eq.s32.totalorder %s13, 0
    %p102 = por %p100, %p101
    %p103 = scmp.ne.s32.totalorder %s89, %s90
    %p104 = scmp.eq.s32.totalorder %s14, 1
    %p105 = por %p103, %p104
    %p107 = scmp.ne.s32.totalorder %s90, %s106
    %p108 = scmp.eq.s32.totalorder %s14, 0
    %p109 = por %p107, %p108
    %p110 = scmp.le.s32.totalorder 1, %s8
    %p111 = scmp.lt.s32.totalorder %s8, 3
    %p112 = pnand %p110, %p111
    %p113 = pneg %p112
    // Predicated region
    $region9: #{graph_convolution_forward.4} parent=5 // pred_check
      _
    $region10: #{graph_convolution_forward.4} parent=5 // pred_check_branch
      %115 = sbr.rel (%p112) target = $region12
    $region11: #{graph_convolution_forward.4} parent=5 // pred_region
      %s116 = ssub.s32 %s8, 1
    $region12: #{graph_convolution_forward.4} parent=5 // pred_fallthru
      _
    %p117 = scmp.lt.s32.totalorder %s8, 2
    // Predicated region
    $region13: #{graph_convolution_forward.4} parent=5 // pred_check
      %p118 = pneg %p117
    $region14: #{graph_convolution_forward.4} parent=5 // pred_check_branch
      %120 = sbr.rel (%p118) target = $region16
    $region15: #{graph_convolution_forward.4} parent=5 // pred_region
      // Predicated region
      $region17: #{graph_convolution_forward.4} parent=15 // pred_check
        %p121 = pneg %p42
      $region18: #{graph_convolution_forward.4} parent=15 // pred_check_branch
        %123 = sbr.rel (%p121) target = $region20
      $region19: #{graph_convolution_forward.4} parent=15 // pred_region
        %s124 = smul.u32 2, %s15
        %s125 = smul.u32 4, %s16
        %p126 = scmp.lt.s32.totalorder %s124, 3
        %s127 = scalar_select %p126, %s124, 3
        %p128 = scmp.lt.s32.totalorder %s125, 3
        %s129 = scalar_select %p128, %s125, 3
        %s130 = smul.addr %s127, 4
        %s131 = sadd.s32 %s129, %s130
        %s132 = smul.addr %s131, 4
        %s133 = scalar_lea.vmem %s0, %s132
        %s134 = smul.u32 2, %s15
        %s135 = smul.u32 4, %s16
      $region20: #{graph_convolution_forward.4} parent=15 // pred_fallthru
        _
      // Predicated region
      $region21: #{graph_convolution_forward.4} parent=15 // pred_check
        %p136 = pneg %p68
      $region22: #{graph_convolution_forward.4} parent=15 // pred_check_branch
        %138 = sbr.rel (%p136) target = $region24
      $region23: #{graph_convolution_forward.4} parent=15 // pred_region
        %s139 = smul.u32 2, %s15
        %p140 = scmp.lt.s32.totalorder %s139, 3
        %s141 = scalar_select %p140, %s139, 3
        %s142 = smul.addr %s141, 2
        %s143 = smul.addr %s142, 4
        %s144 = scalar_lea.vmem %s1, %s143
        %s145 = smul.u32 2, %s15
      $region24: #{graph_convolution_forward.4} parent=15 // pred_fallthru
        _
    $region16: #{graph_convolution_forward.4} parent=5 // pred_fallthru
      _
    %p146 = scmp.le.s32.totalorder 1, %s8
    %p147 = scmp.lt.s32.totalorder %s8, 3
    %p148 = pnand %p146, %p147
    %p149 = pneg %p148
    // Predicated region
    $region25: #{graph_convolution_forward.4} parent=5 // pred_check
      _
    $region26: #{graph_convolution_forward.4} parent=5 // pred_check_branch
      %151 = sbr.rel (%p148) target = $region28
    $region27: #{graph_convolution_forward.4} parent=5 // pred_region
      %s152 = ssub.s32 %s8, 1
      %s153 = smul.u32 2, %s17
      %s154 = smul.u32 4, %s18
      %p155 = scmp.lt.s32.totalorder %s153, 3
      %s156 = scalar_select %p155, %s153, 3
      %p157 = scmp.lt.s32.totalorder %s154, 3
      %s158 = scalar_select %p157, %s154, 3
      %s159 = smul.addr %s156, 4
      %s160 = sadd.s32 %s158, %s159
      %s161 = smul.addr %s160, 4
      %s162 = scalar_lea.vmem %s0, %s161
      %p163 = pneg %p48
      %p164 = pneg %p45
      %s165 = smul.u32 2, %s17
      %p166 = scmp.lt.s32.totalorder %s165, 3
      %s167 = scalar_select %p166, %s165, 3
      %s168 = smul.addr %s167, 2
      %s169 = smul.addr %s168, 4
      %s170 = scalar_lea.vmem %s1, %s169
      %p171 = pneg %p74
      %p172 = pneg %p71
      %p173 = pneg %p102
      %p174 = pneg %p99
      %s175 = smul.u32 2, %s17
      %s176 = smul.u32 4, %s18
      %p177 = scmp.lt.s32.totalorder %s175, 3
      %s178 = scalar_select %p177, %s175, 3
      %p179 = scmp.lt.s32.totalorder %s176, 3
      %s180 = scalar_select %p179, %s176, 3
      %s181 = smul.addr %s178, 4
      %s182 = sadd.s32 %s180, %s181
      %s183 = smul.addr %s182, 4
      %s184 = scalar_lea.vmem %s2, %s183
      %s185 = smul.u32 2, %s17
      %s186 = smul.u32 4, %s18
      %p187 = scmp.lt.s32.totalorder %s185, 3
      %s188 = scalar_select %p187, %s185, 3
      %p189 = scmp.lt.s32.totalorder %s186, 3
      %s190 = scalar_select %p189, %s186, 3
      %s191 = smul.addr %s188, 4
      %s192 = sadd.s32 %s190, %s191
      %s193 = smul.addr %s192, 4
      %s194 = scalar_lea.vmem %s0, %s193
      %s195 = smul.u32 2, %s17
      %s196 = smul.u32 4, %s18
      %s197 = smul.u32 2, %s17
      %p198 = scmp.lt.s32.totalorder %s197, 3
      %s199 = scalar_select %p198, %s197, 3
      %s200 = smul.addr %s199, 2
      %s201 = smul.addr %s200, 4
      %s202 = scalar_lea.vmem %s1, %s201
      %s203 = smul.u32 2, %s17
      %s204 = smul.u32 2, %s17
      %s205 = smul.u32 4, %s18
      %p206 = scmp.lt.s32.totalorder %s204, 3
      %s207 = scalar_select %p206, %s204, 3
      %p208 = scmp.lt.s32.totalorder %s205, 3
      %s209 = scalar_select %p208, %s205, 3
      %s210 = smul.addr %s207, 4
      %s211 = sadd.s32 %s209, %s210
      %s212 = smul.addr %s211, 4
      %s213 = scalar_lea.vmem %s2, %s212
      %s214 = smul.u32 2, %s17
      %s215 = smul.u32 4, %s18
      %v217 = vld [vmem:[%s194] sm:$0xf]
      %v218 = vld [vmem:[%s194 + $0x4] sm:$0xf]
      %v219 = vld [vmem:[%s194 + $0x8] sm:$0xf]
      %v220 = vld [vmem:[%s194 + $0xc] sm:$0xf]
      %v221 = vld [vmem:[%s194 + $0x10] sm:$0xf]
      %v222 = vld [vmem:[%s194 + $0x14] sm:$0xf]
      %v223 = vld [vmem:[%s194 + $0x18] sm:$0xf]
      %v224 = vld [vmem:[%s194 + $0x1c] sm:$0xf]
      %v225 = vld [vmem:[%s202] sm:$0xf]
      %v226 = vld [vmem:[%s202 + $0x4] sm:$0xf]
      %v227 = vld [vmem:[%s202 + $0x8] sm:$0xf]
      %v228 = vld [vmem:[%s202 + $0xc] sm:$0xf]
      %v233 = vunpack.c.l.b16 %v217
      %v234 = vunpack.c.l.b16 %v218
      %v235 = vunpack.c.l.b16 %v219
      %v236 = vunpack.c.l.b16 %v220
      %v237 = vpack.c.b16 %v234, %v233
      %v238 = vpack.c.b16 %v236, %v235
      %v241 = vunpack.c.l.b16 %v225
      %v242 = vunpack.c.l.b16 %v226
      %v243 = vpack.c.b16 %v242, %v241
      %vm245 = vcmask 130048
      %v247 = vsel %vm245, %v237, 0
      %v250 = vsel %vm245, %v238, 0
      %252 = vmatpush.bf16.msra.mxu0 0
      %253 = vmatpush.bf16.msra.mxu0 0
      %254 = vmatpush.bf16.msra.mxu0 0
      %255 = vmatpush.bf16.msra.mxu0 0
      %256 = vmatpush.bf16.msra.mxu0 0
      %257 = vmatpush.bf16.msra.mxu0 0
      %258 = vmatpush.bf16.msra.mxu0 0
      %259 = vmatpush.bf16.msra.mxu0 %v243
      %260 = vmatmul.bf16.gmra.mxu0 %v247
      %v261 = vpop.f32.mrf.mxu0
      %v262 = vadd.f32 0.0, %v261
      %v263 = vpop.f32.mrf.mxu0
      %v264 = vadd.f32 0.0, %v263
      %265 = vmatmul.bf16.gmra.mxu0 %v250
      %v266 = vpop.f32.mrf.mxu0
      %v267 = vadd.f32 0.0, %v266
      %v268 = vpop.f32.mrf.mxu0
      %v269 = vadd.f32 0.0, %v268
      %270 = vdwg.mxu0
      %v275 = vunpack.c.l.b16 %v221
      %v276 = vunpack.c.l.b16 %v222
      %v277 = vunpack.c.l.b16 %v223
      %v278 = vunpack.c.l.b16 %v224
      %v279 = vpack.c.b16 %v276, %v275
      %v280 = vpack.c.b16 %v278, %v277
      %v283 = vunpack.c.l.b16 %v227
      %v284 = vunpack.c.l.b16 %v228
      %v285 = vpack.c.b16 %v284, %v283
      %v288 = vsel %vm245, %v279, 0
      %v291 = vsel %vm245, %v280, 0
      %293 = vmatpush.bf16.msra.mxu0 0
      %294 = vmatpush.bf16.msra.mxu0 0
      %295 = vmatpush.bf16.msra.mxu0 0
      %296 = vmatpush.bf16.msra.mxu0 0
      %297 = vmatpush.bf16.msra.mxu0 0
      %298 = vmatpush.bf16.msra.mxu0 0
      %299 = vmatpush.bf16.msra.mxu0 0
      %300 = vmatpush.bf16.msra.mxu0 %v285
      %301 = vmatmul.bf16.gmra.mxu0 %v288
      %v302 = vpop.f32.mrf.mxu0
      %v303 = vadd.f32 0.0, %v302
      %v304 = vpop.f32.mrf.mxu0
      %v305 = vadd.f32 0.0, %v304
      %306 = vmatmul.bf16.gmra.mxu0 %v291
      %v307 = vpop.f32.mrf.mxu0
      %v308 = vadd.f32 0.0, %v307
      %v309 = vpop.f32.mrf.mxu0
      %v310 = vadd.f32 0.0, %v309
      %311 = vdwg.mxu0
      %v312 = vpack.c.bf16 %v262, %v262
      %v313 = vpack.c.bf16 %v264, %v264
      %v314 = vpack.c.bf16 %v267, %v267
      %v315 = vpack.c.bf16 %v269, %v269
      %v316 = vpack.c.bf16 %v303, %v303
      %v317 = vpack.c.bf16 %v305, %v305
      %v318 = vpack.c.bf16 %v308, %v308
      %v319 = vpack.c.bf16 %v310, %v310
      %vm320 = vcmask 257024
      %321 = vst.msk [vmem:[%s213] sm:$0xf] %vm320, %v312
      %322 = vst.msk [vmem:[%s213 + $0x4] sm:$0xf] %vm320, %v313
      %323 = vst.msk [vmem:[%s213 + $0x8] sm:$0xf] %vm320, %v314
      %324 = vst.msk [vmem:[%s213 + $0xc] sm:$0xf] %vm320, %v315
      %325 = vst.msk [vmem:[%s213 + $0x10] sm:$0xf] %vm320, %v316
      %326 = vst.msk [vmem:[%s213 + $0x14] sm:$0xf] %vm320, %v317
      %327 = vst.msk [vmem:[%s213 + $0x18] sm:$0xf] %vm320, %v318
      %328 = vst.msk [vmem:[%s213 + $0x1c] sm:$0xf] %vm320, %v319
      %s329 = smul.u32 2, %s17
      %s330 = smul.u32 4, %s18
      %p331 = scmp.lt.s32.totalorder %s329, 3
      %s332 = scalar_select %p331, %s329, 3
      %p333 = scmp.lt.s32.totalorder %s330, 3
      %s334 = scalar_select %p333, %s330, 3
      %s335 = smul.addr %s332, 4
      %s336 = sadd.s32 %s334, %s335
      %s337 = smul.addr %s336, 4
      %s338 = scalar_lea.vmem %s2, %s337
      // Predicated region
      $region29: #{graph_convolution_forward.4} parent=27 // pred_check
        %p339 = pneg %p99
      $region30: #{graph_convolution_forward.4} parent=27 // pred_check_branch
        %341 = sbr.rel (%p339) target = $region32
      $region31: #{graph_convolution_forward.4} parent=27 // pred_region
        %s342 = smul.u32 2, %s17
        %s343 = smul.u32 4, %s18
      $region32: #{graph_convolution_forward.4} parent=27 // pred_fallthru
        _
    $region28: #{graph_convolution_forward.4} parent=5 // pred_fallthru
      _
    %p344 = scmp.le.s32.totalorder 2, %s8
    // Predicated region
    $region33: #{graph_convolution_forward.4} parent=5 // pred_check
      %p345 = pneg %p344
    $region34: #{graph_convolution_forward.4} parent=5 // pred_check_branch
      %347 = sbr.rel (%p345) target = $region36
    $region35: #{graph_convolution_forward.4} parent=5 // pred_region
      %s348 = ssub.s32 %s8, 2
      // Predicated region
      $region37: #{graph_convolution_forward.4} parent=35 // pred_check
        %p349 = pneg %p105
      $region38: #{graph_convolution_forward.4} parent=35 // pred_check_branch
        %351 = sbr.rel (%p349) target = $region40
      $region39: #{graph_convolution_forward.4} parent=35 // pred_region
        %s352 = smul.u32 2, %s19
        %s353 = smul.u32 4, %s20
        %p354 = scmp.lt.s32.totalorder %s352, 3
        %s355 = scalar_select %p354, %s352, 3
        %p356 = scmp.lt.s32.totalorder %s353, 3
        %s357 = scalar_select %p356, %s353, 3
        %s358 = smul.addr %s355, 4
        %s359 = sadd.s32 %s357, %s358
        %s360 = smul.addr %s359, 4
        %s361 = scalar_lea.vmem %s2, %s360
      $region40: #{graph_convolution_forward.4} parent=35 // pred_fallthru
        _
    $region36: #{graph_convolution_forward.4} parent=5 // pred_fallthru
      _
  $region6: #{graph_convolution_forward.4} parent=0 // loop_footer
    %s12 = sadd.s32 1, %s8
  $region7: #{graph_convolution_forward.4} parent=0 // loop_footer_branch
    %7 = sbr.rel target = $region3
  $region8: #{graph_convolution_forward.4} parent=0 // loop_exit
    _

// kernel: graph_convolution_forward.5
$region0: #{graph_convolution_forward.5}
  #allocation0 [shape = 'u32[]', space=smem, size = 0x4, offset = 0x4, fixed_abs, tag = 'smem constant byte address 0x4 - core index']
  #allocation1 [shape = 'u32[72,128]{1,0:T(1,128)}', space=vmem, size = 0x9000, scoped, tag = 'internal scratch']
  %s0 = inlined_call_operand.vmem [shape: s8[4,32,32], index: 0, kind: input, shape index: {}]
  %s1 = inlined_call_operand.vmem [shape: bf16[4,32,32], index: 1, kind: input, shape index: {}]
  %s2 = inlined_call_operand.vmem [shape: f32[4,1,1], index: 2, kind: input, shape index: {}]
  %s3 = inlined_call_operand.vmem [shape: f32[4,32,32], index: 3, kind: output, shape index: {}]
  %s4 = sld [smem:[#allocation0]]
  $region45: #{graph_convolution_forward.5} parent=0
    _
  %s6 = ssub.s32 1, %s4
  %s7 = scalar_select 0, %s6, %s4
  loop: start=0, step=1, limit=4
  $region2: #{graph_convolution_forward.5} parent=0 // loop_pre_header
    _
  $region3: #{graph_convolution_forward.5} parent=0 // loop_header
    %s9 = sphi 0, %s13
    %p10 = scmp.ge.s32.totalorder %s9, 4
    %s16 = sphi 0, %s28
    %s17 = sphi 0, %s24
    %s18 = sphi 0, %s16
    %s19 = sphi 0, %s17
    %s20 = sphi 0, %s18
    %s21 = sphi 0, %s19
    %s33 = sphi 0, %s35
    %s36 = sphi 0, %s33
    %s37 = sphi 0, %s36
    %s53 = sphi 0, %s37
    %s59 = sphi 0, %s61
    %s62 = sphi 0, %s59
    %s63 = sphi 0, %s62
    %s79 = sphi 0, %s63
    %s85 = sphi 0, %s87
    %s88 = sphi 0, %s85
    %s89 = sphi 0, %s88
    %s105 = sphi 0, %s89
    %s113 = sphi 0, %s115
    %s116 = sphi 0, %s113
    %s117 = sphi 0, %s116
    %s133 = sphi 0, %s117
  $region4: #{graph_convolution_forward.5} parent=0 // loop_header_branch
    %12 = sbr.rel (%p10) target = $region8
  $region5: #{graph_convolution_forward.5} parent=0 // loop_body
    %s14 = ssub.s32 %s9, 1
    %s15 = ssub.s32 %s9, 2
    %s22 = sadd.s32 1, %s17
    %p23 = scmp.ge.s32.totalorder %s22, 1
    %s24 = scalar_select %p23, 0, %s22
    %s25 = sadd.s32 1, %s16
    %s26 = scalar_select %p23, %s25, %s16
    %p27 = scmp.ge.s32.totalorder %s26, 2
    %s28 = scalar_select %p27, 0, %s26
    %s29 = ssub.s32 %s16, %s28
    %s30 = ssub.s32 %s17, %s24
    %s31 = sor.u32 %s29, %s30
    %p32 = scmp.eq.s32.totalorder %s31, 0
    %s34 = sadd.s32 %s33, 1
    %s35 = scalar_select %p32, %s33, %s34
    %p38 = pneg %p32
    %p39 = scmp.eq.s32.totalorder %s9, 1
    %p40 = por %p38, %p39
    %p41 = scmp.ne.s32.totalorder %s33, %s36
    %p42 = scmp.eq.s32.totalorder %s9, 0
    %p43 = por %p41, %p42
    %p44 = scmp.ne.s32.totalorder %s33, %s36
    %p45 = scmp.eq.s32.totalorder %s14, 1
    %p46 = por %p44, %p45
    %p47 = scmp.ne.s32.totalorder %s36, %s37
    %p48 = scmp.eq.s32.totalorder %s14, 0
    %p49 = por %p47, %p48
    %p50 = scmp.ne.s32.totalorder %s36, %s37
    %p51 = scmp.eq.s32.totalorder %s15, 1
    %p52 = por %p50, %p51
    %p54 = scmp.ne.s32.totalorder %s37, %s53
    %p55 = scmp.eq.s32.totalorder %s15, 0
    %p56 = por %p54, %p55
    %s57 = ssub.s32 %s16, %s28
    %p58 = scmp.eq.s32.totalorder %s57, 0
    %s60 = sadd.s32 %s59, 1
    %s61 = scalar_select %p58, %s59, %s60
    %p64 = pneg %p58
    %p65 = scmp.eq.s32.totalorder %s9, 1
    %p66 = por %p64, %p65
    %p67 = scmp.ne.s32.totalorder %s59, %s62
    %p68 = scmp.eq.s32.totalorder %s9, 0
    %p69 = por %p67, %p68
    %p70 = scmp.ne.s32.totalorder %s59, %s62
    %p71 = scmp.eq.s32.totalorder %s14, 1
    %p72 = por %p70, %p71
    %p73 = scmp.ne.s32.totalorder %s62, %s63
    %p74 = scmp.eq.s32.totalorder %s14, 0
    %p75 = por %p73, %p74
    %p76 = scmp.ne.s32.totalorder %s62, %s63
    %p77 = scmp.eq.s32.totalorder %s15, 1
    %p78 = por %p76, %p77
    %p80 = scmp.ne.s32.totalorder %s63, %s79
    %p81 = scmp.eq.s32.totalorder %s15, 0
    %p82 = por %p80, %p81
    %s83 = ssub.s32 %s16, %s28
    %p84 = scmp.eq.s32.totalorder %s83, 0
    %s86 = sadd.s32 %s85, 1
    %s87 = scalar_select %p84, %s85, %s86
    %p90 = pneg %p84
    %p91 = scmp.eq.s32.totalorder %s9, 1
    %p92 = por %p90, %p91
    %p93 = scmp.ne.s32.totalorder %s85, %s88
    %p94 = scmp.eq.s32.totalorder %s9, 0
    %p95 = por %p93, %p94
    %p96 = scmp.ne.s32.totalorder %s85, %s88
    %p97 = scmp.eq.s32.totalorder %s14, 1
    %p98 = por %p96, %p97
    %p99 = scmp.ne.s32.totalorder %s88, %s89
    %p100 = scmp.eq.s32.totalorder %s14, 0
    %p101 = por %p99, %p100
    %p102 = scmp.ne.s32.totalorder %s88, %s89
    %p103 = scmp.eq.s32.totalorder %s15, 1
    %p104 = por %p102, %p103
    %p106 = scmp.ne.s32.totalorder %s89, %s105
    %p107 = scmp.eq.s32.totalorder %s15, 0
    %p108 = por %p106, %p107
    %s109 = ssub.s32 %s16, %s28
    %s110 = ssub.s32 %s17, %s24
    %s111 = sor.u32 %s109, %s110
    %p112 = scmp.eq.s32.totalorder %s111, 0
    %s114 = sadd.s32 %s113, 1
    %s115 = scalar_select %p112, %s113, %s114
    %p118 = pneg %p112
    %p119 = scmp.eq.s32.totalorder %s9, 1
    %p120 = por %p118, %p119
    %p121 = scmp.ne.s32.totalorder %s113, %s116
    %p122 = scmp.eq.s32.totalorder %s9, 0
    %p123 = por %p121, %p122
    %p124 = scmp.ne.s32.totalorder %s113, %s116
    %p125 = scmp.eq.s32.totalorder %s14, 1
    %p126 = por %p124, %p125
    %p127 = scmp.ne.s32.totalorder %s116, %s117
    %p128 = scmp.eq.s32.totalorder %s14, 0
    %p129 = por %p127, %p128
    %p130 = scmp.ne.s32.totalorder %s116, %s117
    %p131 = scmp.eq.s32.totalorder %s15, 1
    %p132 = por %p130, %p131
    %p134 = scmp.ne.s32.totalorder %s117, %s133
    %p135 = scmp.eq.s32.totalorder %s15, 0
    %p136 = por %p134, %p135
    %p137 = scmp.le.s32.totalorder 1, %s9
    %p138 = scmp.lt.s32.totalorder %s9, 3
    %p139 = pnand %p137, %p138
    %p140 = pneg %p139
    // Predicated region
    $region9: #{graph_convolution_forward.5} parent=5 // pred_check
      _
    $region10: #{graph_convolution_forward.5} parent=5 // pred_check_branch
      %142 = sbr.rel (%p139) target = $region12
    $region11: #{graph_convolution_forward.5} parent=5 // pred_region
      %s143 = ssub.s32 %s9, 1
    $region12: #{graph_convolution_forward.5} parent=5 // pred_fallthru
      _
    %p144 = scmp.lt.s32.totalorder %s9, 2
    // Predicated region
    $region13: #{graph_convolution_forward.5} parent=5 // pred_check
      %p145 = pneg %p144
    $region14: #{graph_convolution_forward.5} parent=5 // pred_check_branch
      %147 = sbr.rel (%p145) target = $region16
    $region15: #{graph_convolution_forward.5} parent=5 // pred_region
      // Predicated region
      $region17: #{graph_convolution_forward.5} parent=15 // pred_check
        %p148 = pneg %p43
      $region18: #{graph_convolution_forward.5} parent=15 // pred_check_branch
        %150 = sbr.rel (%p148) target = $region20
      $region19: #{graph_convolution_forward.5} parent=15 // pred_region
        %s151 = smul.u32 2, %s16
        %p152 = scmp.lt.s32.totalorder %s151, 3
        %s153 = scalar_select %p152, %s151, 3
        %p154 = scmp.lt.s32.totalorder %s17, 0
        %s155 = scalar_select %p154, %s17, 0
        %s156 = sadd.s32 %s155, %s153
        %s157 = smul.addr %s156, 8
        %s158 = scalar_lea.vmem %s0, %s157
        %s159 = smul.u32 2, %s16
      $region20: #{graph_convolution_forward.5} parent=15 // pred_fallthru
        _
      // Predicated region
      $region21: #{graph_convolution_forward.5} parent=15 // pred_check
        %p160 = pneg %p69
      $region22: #{graph_convolution_forward.5} parent=15 // pred_check_branch
        %162 = sbr.rel (%p160) target = $region24
      $region23: #{graph_convolution_forward.5} parent=15 // pred_region
        %s163 = smul.u32 2, %s16
        %p164 = scmp.lt.s32.totalorder %s163, 3
        %s165 = scalar_select %p164, %s163, 3
        %s166 = smul.addr %s165, 4
        %s167 = smul.addr %s166, 4
        %s168 = scalar_lea.vmem %s1, %s167
        %s169 = smul.u32 2, %s16
      $region24: #{graph_convolution_forward.5} parent=15 // pred_fallthru
        _
      // Predicated region
      $region25: #{graph_convolution_forward.5} parent=15 // pred_check
        %p170 = pneg %p95
      $region26: #{graph_convolution_forward.5} parent=15 // pred_check_branch
        %172 = sbr.rel (%p170) target = $region28
      $region27: #{graph_convolution_forward.5} parent=15 // pred_region
        %s173 = smul.u32 2, %s16
        %p174 = scmp.lt.s32.totalorder %s173, 3
        %s175 = scalar_select %p174, %s173, 3
        %s176 = scalar_lea.vmem %s2, %s175
        %s177 = smul.u32 2, %s16
      $region28: #{graph_convolution_forward.5} parent=15 // pred_fallthru
        _
    $region16: #{graph_convolution_forward.5} parent=5 // pred_fallthru
      _
    %p178 = scmp.le.s32.totalorder 1, %s9
    %p179 = scmp.lt.s32.totalorder %s9, 3
    %p180 = pnand %p178, %p179
    %p181 = pneg %p180
    // Predicated region
    $region29: #{graph_convolution_forward.5} parent=5 // pred_check
      _
    $region30: #{graph_convolution_forward.5} parent=5 // pred_check_branch
      %183 = sbr.rel (%p180) target = $region32
    $region31: #{graph_convolution_forward.5} parent=5 // pred_region
      %s184 = ssub.s32 %s9, 1
      %s185 = smul.u32 2, %s18
      %p186 = scmp.lt.s32.totalorder %s185, 3
      %s187 = scalar_select %p186, %s185, 3
      %p188 = scmp.lt.s32.totalorder %s19, 0
      %s189 = scalar_select %p188, %s19, 0
      %s190 = sadd.s32 %s189, %s187
      %s191 = smul.addr %s190, 8
      %s192 = scalar_lea.vmem %s0, %s191
      %p193 = pneg %p49
      %p194 = pneg %p46
      %s195 = smul.u32 2, %s18
      %p196 = scmp.lt.s32.totalorder %s195, 3
      %s197 = scalar_select %p196, %s195, 3
      %s198 = smul.addr %s197, 4
      %s199 = smul.addr %s198, 4
      %s200 = scalar_lea.vmem %s1, %s199
      %p201 = pneg %p75
      %p202 = pneg %p72
      %s203 = smul.u32 2, %s18
      %p204 = scmp.lt.s32.totalorder %s203, 3
      %s205 = scalar_select %p204, %s203, 3
      %s206 = scalar_lea.vmem %s2, %s205
      %p207 = pneg %p101
      %p208 = pneg %p98
      %p209 = pneg %p129
      %p210 = pneg %p126
      %s211 = smul.u32 2, %s18
      %s212 = smul.u32 4, %s19
      %p213 = scmp.lt.s32.totalorder %s211, 3
      %s214 = scalar_select %p213, %s211, 3
      %p215 = scmp.lt.s32.totalorder %s212, 3
      %s216 = scalar_select %p215, %s212, 3
      %s217 = smul.addr %s214, 4
      %s218 = sadd.s32 %s216, %s217
      %s219 = smul.addr %s218, 8
      %s220 = scalar_lea.vmem %s3, %s219
      %s221 = smul.u32 2, %s18
      %p222 = scmp.lt.s32.totalorder %s221, 3
      %s223 = scalar_select %p222, %s221, 3
      %p224 = scmp.lt.s32.totalorder %s19, 0
      %s225 = scalar_select %p224, %s19, 0
      %s226 = sadd.s32 %s225, %s223
      %s227 = smul.addr %s226, 8
      %s228 = scalar_lea.vmem %s0, %s227
      %s229 = smul.u32 2, %s18
      %s230 = smul.u32 2, %s18
      %p231 = scmp.lt.s32.totalorder %s230, 3
      %s232 = scalar_select %p231, %s230, 3
      %s233 = smul.addr %s232, 4
      %s234 = smul.addr %s233, 4
      %s235 = scalar_lea.vmem %s1, %s234
      %s236 = smul.u32 2, %s18
      %s237 = smul.u32 2, %s18
      %p238 = scmp.lt.s32.totalorder %s237, 3
      %s239 = scalar_select %p238, %s237, 3
      %s240 = scalar_lea.vmem %s2, %s239
      %s241 = smul.u32 2, %s18
      %s242 = smul.u32 2, %s18
      %s243 = smul.u32 4, %s19
      %p244 = scmp.lt.s32.totalorder %s242, 3
      %s245 = scalar_select %p244, %s242, 3
      %p246 = scmp.lt.s32.totalorder %s243, 3
      %s247 = scalar_select %p246, %s243, 3
      %s248 = smul.addr %s245, 4
      %s249 = sadd.s32 %s247, %s248
      %s250 = smul.addr %s249, 8
      %s251 = scalar_lea.vmem %s3, %s250
      %s252 = smul.u32 2, %s18
      %s253 = smul.u32 4, %s19
      %v255 = vld [vmem:[%s228] sm:$0xff]
      %v256 = vld [vmem:[%s228 + $0x8] sm:$0xff]
      %v257 = vunpack.c.0.s8 %v255
      %v258 = vunpack.c.1.s8 %v255
      %v259 = vunpack.c.2.s8 %v255
      %v260 = vunpack.c.3.s8 %v255
      %v261 = vunpack.c.0.s8 %v256
      %v262 = vunpack.c.1.s8 %v256
      %v263 = vunpack.c.2.s8 %v256
      %v264 = vunpack.c.3.s8 %v256
      %v265 = vcvt.s32.f32 %v257
      %v266 = vcvt.s32.f32 %v258
      %v267 = vcvt.s32.f32 %v259
      %v268 = vcvt.s32.f32 %v260
      %v269 = vcvt.s32.f32 %v261
      %v270 = vcvt.s32.f32 %v262
      %v271 = vcvt.s32.f32 %v263
      %v272 = vcvt.s32.f32 %v264
      %v273 = vpack.c.bf16 %v265, %v265
      %v274 = vpack.c.bf16 %v266, %v266
      %v275 = vpack.c.bf16 %v267, %v267
      %v276 = vpack.c.bf16 %v268, %v268
      %v277 = vpack.c.bf16 %v269, %v269
      %v278 = vpack.c.bf16 %v270, %v270
      %v279 = vpack.c.bf16 %v271, %v271
      %v280 = vpack.c.bf16 %v272, %v272
      %v281 = vld [vmem:[%s235] sm:$0xf]
      %v282 = vld [vmem:[%s235 + $0x4] sm:$0xf]
      %v283 = vld [vmem:[%s235 + $0x8] sm:$0xf]
      %v284 = vld [vmem:[%s235 + $0xc] sm:$0xf]
      %v285 = vld [vmem:[%s235 + $0x10] sm:$0xf]
      %v286 = vld [vmem:[%s235 + $0x14] sm:$0xf]
      %v287 = vld [vmem:[%s235 + $0x18] sm:$0xf]
      %v288 = vld [vmem:[%s235 + $0x1c] sm:$0xf]
      %v293 = vunpack.c.l.b16 %v273
      %v294 = vunpack.c.l.b16 %v274
      %v295 = vunpack.c.l.b16 %v275
      %v296 = vunpack.c.l.b16 %v276
      %v297 = vpack.c.b16 %v294, %v293
      %v298 = vpack.c.b16 %v296, %v295
      %v303 = vunpack.c.l.b16 %v281
      %v304 = vunpack.c.l.b16 %v282
      %v305 = vunpack.c.l.b16 %v283
      %v306 = vunpack.c.l.b16 %v284
      %v307 = vpack.c.b16 %v304, %v303
      %v308 = vpack.c.b16 %v306, %v305
      %vm311 = vcmask 261120
      %v313 = vsel %vm311, %v297, 0
      %v316 = vsel %vm311, %v298, 0
      %318 = vmatpush.bf16.msra.mxu0 0
      %319 = vmatpush.bf16.msra.mxu0 0
      %320 = vmatpush.bf16.msra.mxu0 0
      %321 = vmatpush.bf16.msra.mxu0 0
      %322 = vmatpush.bf16.msra.mxu0 0
      %323 = vmatpush.bf16.msra.mxu0 0
      %324 = vmatpush.bf16.msra.mxu0 %v308
      %325 = vmatpush.bf16.msra.mxu0 %v307
      %326 = vmatmul.bf16.gmra.mxu0 %v313
      %v327 = vpop.f32.mrf.mxu0
      %v328 = vadd.f32 0.0, %v327
      %v329 = vpop.f32.mrf.mxu0
      %v330 = vadd.f32 0.0, %v329
      %331 = vmatmul.bf16.gmra.mxu0 %v316
      %v332 = vpop.f32.mrf.mxu0
      %v333 = vadd.f32 0.0, %v332
      %v334 = vpop.f32.mrf.mxu0
      %v335 = vadd.f32 0.0, %v334
      %336 = vdwg.mxu0
      %v341 = vunpack.c.l.b16 %v277
      %v342 = vunpack.c.l.b16 %v278
      %v343 = vunpack.c.l.b16 %v279
      %v344 = vunpack.c.l.b16 %v280
      %v345 = vpack.c.b16 %v342, %v341
      %v346 = vpack.c.b16 %v344, %v343
      %v351 = vunpack.c.l.b16 %v285
      %v352 = vunpack.c.l.b16 %v286
      %v353 = vunpack.c.l.b16 %v287
      %v354 = vunpack.c.l.b16 %v288
      %v355 = vpack.c.b16 %v352, %v351
      %v356 = vpack.c.b16 %v354, %v353
      %v360 = vsel %vm311, %v345, 0
      %v363 = vsel %vm311, %v346, 0
      %365 = vmatpush.bf16.msra.mxu0 0
      %366 = vmatpush.bf16.msra.mxu0 0
      %367 = vmatpush.bf16.msra.mxu0 0
      %368 = vmatpush.bf16.msra.mxu0 0
      %369 = vmatpush.bf16.msra.mxu0 0
      %370 = vmatpush.bf16.msra.mxu0 0
      %371 = vmatpush.bf16.msra.mxu0 %v356
      %372 = vmatpush.bf16.msra.mxu0 %v355
      %373 = vmatmul.bf16.gmra.mxu0 %v360
      %v374 = vpop.f32.mrf.mxu0
      %v375 = vadd.f32 0.0, %v374
      %v376 = vpop.f32.mrf.mxu0
      %v377 = vadd.f32 0.0, %v376
      %378 = vmatmul.bf16.gmra.mxu0 %v363
      %v379 = vpop.f32.mrf.mxu0
      %v380 = vadd.f32 0.0, %v379
      %v381 = vpop.f32.mrf.mxu0
      %v382 = vadd.f32 0.0, %v381
      %383 = vdwg.mxu0
      %v384 = vld [vmem:[%s240] sm:$0x1]
      %v385 = vld [vmem:[%s240 + $0x1] sm:$0x1]
      %v388 = vperm.slane %v384, 0
      %v389 = vperm.slane %v385, 0
      %390 = vset.pattern.permute.xlu0 0
      %391 = vperm.xlu0 %390, %v388
      %v392 = vpop.permute.xlu0 %391
      %394 = vset.pattern.permute.xlu0 0
      %395 = vperm.xlu0 %394, %v389
      %v396 = vpop.permute.xlu0 %395
      %v398 = vmul.f32 %v328, %v392
      %v399 = vmul.f32 %v330, %v392
      %v400 = vmul.f32 %v333, %v392
      %v401 = vmul.f32 %v335, %v392
      %v402 = vmul.f32 %v375, %v396
      %v403 = vmul.f32 %v377, %v396
      %v404 = vmul.f32 %v380, %v396
      %v405 = vmul.f32 %v382, %v396
      %406 = vst.msk [vmem:[%s251] sm:$0xff] %vm311, %v398
      %407 = vst.msk [vmem:[%s251 + $0x8] sm:$0xff] %vm311, %v399
      %408 = vst.msk [vmem:[%s251 + $0x10] sm:$0xff] %vm311, %v400
      %409 = vst.msk [vmem:[%s251 + $0x18] sm:$0xff] %vm311, %v401
      %410 = vst.msk [vmem:[%s251 + $0x20] sm:$0xff] %vm311, %v402
      %411 = vst.msk [vmem:[%s251 + $0x28] sm:$0xff] %vm311, %v403
      %412 = vst.msk [vmem:[%s251 + $0x30] sm:$0xff] %vm311, %v404
      %413 = vst.msk [vmem:[%s251 + $0x38] sm:$0xff] %vm311, %v405
      %s414 = smul.u32 2, %s18
      %s415 = smul.u32 4, %s19
      %p416 = scmp.lt.s32.totalorder %s414, 3
      %s417 = scalar_select %p416, %s414, 3
      %p418 = scmp.lt.s32.totalorder %s415, 3
      %s419 = scalar_select %p418, %s415, 3
      %s420 = smul.addr %s417, 4
      %s421 = sadd.s32 %s419, %s420
      %s422 = smul.addr %s421, 8
      %s423 = scalar_lea.vmem %s3, %s422
      // Predicated region
      $region33: #{graph_convolution_forward.5} parent=31 // pred_check
        %p424 = pneg %p126
      $region34: #{graph_convolution_forward.5} parent=31 // pred_check_branch
        %426 = sbr.rel (%p424) target = $region36
      $region35: #{graph_convolution_forward.5} parent=31 // pred_region
        %s427 = smul.u32 2, %s18
        %s428 = smul.u32 4, %s19
      $region36: #{graph_convolution_forward.5} parent=31 // pred_fallthru
        _
    $region32: #{graph_convolution_forward.5} parent=5 // pred_fallthru
      _
    %p429 = scmp.le.s32.totalorder 2, %s9
    // Predicated region
    $region37: #{graph_convolution_forward.5} parent=5 // pred_check
      %p430 = pneg %p429
    $region38: #{graph_convolution_forward.5} parent=5 // pred_check_branch
      %432 = sbr.rel (%p430) target = $region40
    $region39: #{graph_convolution_forward.5} parent=5 // pred_region
      %s433 = ssub.s32 %s9, 2
      // Predicated region
      $region41: #{graph_convolution_forward.5} parent=39 // pred_check
        %p434 = pneg %p132
      $region42: #{graph_convolution_forward.5} parent=39 // pred_check_branch
        %436 = sbr.rel (%p434) target = $region44
      $region43: #{graph_convolution_forward.5} parent=39 // pred_region
        %s437 = smul.u32 2, %s20
        %s438 = smul.u32 4, %s21
        %p439 = scmp.lt.s32.totalorder %s437, 3
        %s440 = scalar_select %p439, %s437, 3
        %p441 = scmp.lt.s32.totalorder %s438, 3
        %s442 = scalar_select %p441, %s438, 3
        %s443 = smul.addr %s440, 4
        %s444 = sadd.s32 %s442, %s443
        %s445 = smul.addr %s444, 8
        %s446 = scalar_lea.vmem %s3, %s445
      $region44: #{graph_convolution_forward.5} parent=39 // pred_fallthru
        _
    $region40: #{graph_convolution_forward.5} parent=5 // pred_fallthru
      _
  $region6: #{graph_convolution_forward.5} parent=0 // loop_footer
    %s13 = sadd.s32 1, %s9
  $region7: #{graph_convolution_forward.5} parent=0 // loop_footer_branch
    %8 = sbr.rel target = $region3
  $region8: #{graph_convolution_forward.5} parent=0 // loop_exit
    _

// kernel: graph_convolution_forward.7
$region0: #{graph_convolution_forward.7}
  #allocation0 [shape = 'u32[]', space=smem, size = 0x4, offset = 0x4, fixed_abs, tag = 'smem constant byte address 0x4 - core index']
  #allocation1 [shape = 'u32[72,128]{1,0:T(1,128)}', space=vmem, size = 0x9000, scoped, tag = 'internal scratch']
  %s0 = inlined_call_operand.vmem [shape: f32[4,32,32], index: 0, kind: input, shape index: {}]
  %s1 = inlined_call_operand.vmem [shape: f32[32,1], index: 1, kind: input, shape index: {}]
  %s2 = inlined_call_operand.vmem [shape: f32[32,1], index: 2, kind: input, shape index: {}]
  %s3 = inlined_call_operand.hbm [shape: f32[4,32,32], index: 3, kind: output, shape index: {}]
  %s4 = sld [smem:[#allocation0]]
  $region22: #{graph_convolution_forward.7} parent=0
    _
  %s6 = ssub.s32 1, %s4
  %s7 = scalar_select 0, %s6, %s4
  $region1: #{graph_convolution_forward.7} parent=0
    #allocation2 [shape = 'u8[65536]{0}', space=vmem, size = 0x10000, scoped, tag = 'output window, operand 0, single buffered']
    #allocation3 [shape = 's32[1]{0}', space=sflag, size = 0x4, scoped, tag = 'scoped memory for graph_convolution_forward.7']
    %8 = vsyncpa [#allocation3], 0
    // Predicated region
    $region2: #{graph_convolution_forward.7} parent=1 // pred_check
      _
    $region3: #{graph_convolution_forward.7} parent=1 // pred_check_branch
      %10 = sbr.rel (0) target = $region5
    $region4: #{graph_convolution_forward.7} parent=1 // pred_region
      _
    $region5: #{graph_convolution_forward.7} parent=1 // pred_fallthru
      _
    // Predicated region
    $region6: #{graph_convolution_forward.7} parent=1 // pred_check
      _
    $region7: #{graph_convolution_forward.7} parent=1 // pred_check_branch
      %12 = sbr.rel (0) target = $region9
    $region8: #{graph_convolution_forward.7} parent=1 // pred_region
      _
    $region9: #{graph_convolution_forward.7} parent=1 // pred_fallthru
      _
    // Predicated region
    $region10: #{graph_convolution_forward.7} parent=1 // pred_check
      _
    $region11: #{graph_convolution_forward.7} parent=1 // pred_check_branch
      %14 = sbr.rel (0) target = $region13
    $region12: #{graph_convolution_forward.7} parent=1 // pred_region
      _
    $region13: #{graph_convolution_forward.7} parent=1 // pred_fallthru
      _
    %v15 = vld [vmem:[%s0] sm:$0xff]
    %v16 = vld [vmem:[%s0 + $0x8] sm:$0xff]
    %v17 = vld [vmem:[%s0 + $0x10] sm:$0xff]
    %v18 = vld [vmem:[%s0 + $0x18] sm:$0xff]
    %v19 = vld [vmem:[%s0 + $0x20] sm:$0xff]
    %v20 = vld [vmem:[%s0 + $0x28] sm:$0xff]
    %v21 = vld [vmem:[%s0 + $0x30] sm:$0xff]
    %v22 = vld [vmem:[%s0 + $0x38] sm:$0xff]
    %v23 = vld [vmem:[%s0 + $0x40] sm:$0xff]
    %v24 = vld [vmem:[%s0 + $0x48] sm:$0xff]
    %v25 = vld [vmem:[%s0 + $0x50] sm:$0xff]
    %v26 = vld [vmem:[%s0 + $0x58] sm:$0xff]
    %v27 = vld [vmem:[%s0 + $0x60] sm:$0xff]
    %v28 = vld [vmem:[%s0 + $0x68] sm:$0xff]
    %v29 = vld [vmem:[%s0 + $0x70] sm:$0xff]
    %v30 = vld [vmem:[%s0 + $0x78] sm:$0xff]
    %v31 = vld [vmem:[%s1] sm:$0xff]
    %v32 = vld [vmem:[%s1 + $0x8] sm:$0xff]
    %v33 = vld [vmem:[%s1 + $0x10] sm:$0xff]
    %v34 = vld [vmem:[%s1 + $0x18] sm:$0xff]
    %36 = vset.pattern.permute.xlu0 0
    %37 = vperm.xlu0 %36, %v31
    %v38 = vpop.permute.xlu0 %37
    %41 = vset.pattern.permute.xlu0 0
    %42 = vperm.xlu0 %41, %v32
    %v43 = vpop.permute.xlu0 %42
    %46 = vset.pattern.permute.xlu0 0
    %47 = vperm.xlu0 %46, %v33
    %v48 = vpop.permute.xlu0 %47
    %51 = vset.pattern.permute.xlu0 0
    %52 = vperm.xlu0 %51, %v34
    %v53 = vpop.permute.xlu0 %52
    %v55 = vmul.f32 %v15, %v38
    %v56 = vmul.f32 %v16, %v43
    %v57 = vmul.f32 %v17, %v48
    %v58 = vmul.f32 %v18, %v53
    %v59 = vmul.f32 %v19, %v38
    %v60 = vmul.f32 %v20, %v43
    %v61 = vmul.f32 %v21, %v48
    %v62 = vmul.f32 %v22, %v53
    %v63 = vmul.f32 %v23, %v38
    %v64 = vmul.f32 %v24, %v43
    %v65 = vmul.f32 %v25, %v48
    %v66 = vmul.f32 %v26, %v53
    %v67 = vmul.f32 %v27, %v38
    %v68 = vmul.f32 %v28, %v43
    %v69 = vmul.f32 %v29, %v48
    %v70 = vmul.f32 %v30, %v53
    %v71 = vld [vmem:[%s2] sm:$0xff]
    %v72 = vld [vmem:[%s2 + $0x8] sm:$0xff]
    %v73 = vld [vmem:[%s2 + $0x10] sm:$0xff]
    %v74 = vld [vmem:[%s2 + $0x18] sm:$0xff]
    %76 = vset.pattern.permute.xlu0 0
    %77 = vperm.xlu0 %76, %v71
    %v78 = vpop.permute.xlu0 %77
    %81 = vset.pattern.permute.xlu0 0
    %82 = vperm.xlu0 %81, %v72
    %v83 = vpop.permute.xlu0 %82
    %86 = vset.pattern.permute.xlu0 0
    %87 = vperm.xlu0 %86, %v73
    %v88 = vpop.permute.xlu0 %87
    %91 = vset.pattern.permute.xlu0 0
    %92 = vperm.xlu0 %91, %v74
    %v93 = vpop.permute.xlu0 %92
    %v95 = vadd.f32 %v55, %v78
    %v96 = vadd.f32 %v56, %v83
    %v97 = vadd.f32 %v57, %v88
    %v98 = vadd.f32 %v58, %v93
    %v99 = vadd.f32 %v59, %v78
    %v100 = vadd.f32 %v60, %v83
    %v101 = vadd.f32 %v61, %v88
    %v102 = vadd.f32 %v62, %v93
    %v103 = vadd.f32 %v63, %v78
    %v104 = vadd.f32 %v64, %v83
    %v105 = vadd.f32 %v65, %v88
    %v106 = vadd.f32 %v66, %v93
    %v107 = vadd.f32 %v67, %v78
    %v108 = vadd.f32 %v68, %v83
    %v109 = vadd.f32 %v69, %v88
    %v110 = vadd.f32 %v70, %v93
    %v111 = vtanh.pop %v95
    %v112 = vtanh.pop %v96
    %v113 = vtanh.pop %v97
    %v114 = vtanh.pop %v98
    %v115 = vtanh.pop %v99
    %v116 = vtanh.pop %v100
    %v117 = vtanh.pop %v101
    %v118 = vtanh.pop %v102
    %v119 = vtanh.pop %v103
    %v120 = vtanh.pop %v104
    %v121 = vtanh.pop %v105
    %v122 = vtanh.pop %v106
    %v123 = vtanh.pop %v107
    %v124 = vtanh.pop %v108
    %v125 = vtanh.pop %v109
    %v126 = vtanh.pop %v110
    %vm127 = vcmask 261120
    %128 = vst.msk [vmem:[#allocation2] sm:$0xff] %vm127, %v111
    %129 = vst.msk [vmem:[#allocation2 + $0x8] sm:$0xff] %vm127, %v112
    %130 = vst.msk [vmem:[#allocation2 + $0x10] sm:$0xff] %vm127, %v113
    %131 = vst.msk [vmem:[#allocation2 + $0x18] sm:$0xff] %vm127, %v114
    %132 = vst.msk [vmem:[#allocation2 + $0x20] sm:$0xff] %vm127, %v115
    %133 = vst.msk [vmem:[#allocation2 + $0x28] sm:$0xff] %vm127, %v116
    %134 = vst.msk [vmem:[#allocation2 + $0x30] sm:$0xff] %vm127, %v117
    %135 = vst.msk [vmem:[#allocation2 + $0x38] sm:$0xff] %vm127, %v118
    %136 = vst.msk [vmem:[#allocation2 + $0x40] sm:$0xff] %vm127, %v119
    %137 = vst.msk [vmem:[#allocation2 + $0x48] sm:$0xff] %vm127, %v120
    %138 = vst.msk [vmem:[#allocation2 + $0x50] sm:$0xff] %vm127, %v121
    %139 = vst.msk [vmem:[#allocation2 + $0x58] sm:$0xff] %vm127, %v122
    %140 = vst.msk [vmem:[#allocation2 + $0x60] sm:$0xff] %vm127, %v123
    %141 = vst.msk [vmem:[#allocation2 + $0x68] sm:$0xff] %vm127, %v124
    %142 = vst.msk [vmem:[#allocation2 + $0x70] sm:$0xff] %vm127, %v125
    %143 = vst.msk [vmem:[#allocation2 + $0x78] sm:$0xff] %vm127, %v126
    // Predicated region
    $region14: #{graph_convolution_forward.7} parent=1 // pred_check
      _
    $region15: #{graph_convolution_forward.7} parent=1 // pred_check_branch
      %145 = sbr.rel (0) target = $region17
    $region16: #{graph_convolution_forward.7} parent=1 // pred_region
      %147 = vsyncadd [#allocation3], 0
      %s148 = sshll.u32 [#allocation2], 4
      %s149 = int_to_ptr.vmem [resolvable:$true] %s148
      %s150 = sshll.u32 %s3, 4
      %s151 = int_to_ptr.hbm [resolvable:$true] %s150
      %156 = dma.vmem_to_hbm [thread:$0]  %s149, 2048, %s151, [#allocation3], 128, 128, 8
    $region17: #{graph_convolution_forward.7} parent=1 // pred_fallthru
      _
    // Predicated region
    $region18: #{graph_convolution_forward.7} parent=1 // pred_check
      _
    $region19: #{graph_convolution_forward.7} parent=1 // pred_check_branch
      %158 = sbr.rel (0) target = $region21
    $region20: #{graph_convolution_forward.7} parent=1 // pred_region
      %160 = dma.done [#allocation3], 2048
    $region21: #{graph_convolution_forward.7} parent=1 // pred_fallthru
      _
    %161 = vsyncpa [#allocation3], 1

</llo_original>
